<compile_context>
chip_gen: v7x
topology: tpu7x:2x2x1
jax: 0.10.0
libtpu: 0.0.40
codegen_flags: <defaults>
</compile_context>

<pallas_src>
import jax
import jax.numpy as jnp
from jax import lax
from jax.experimental import pallas as pl
from jax.experimental.pallas import tpu as pltpu

DIM = 128        # embed dim (module default 768; scaled down, still 8-head divisible)
NUM_HEADS = 8    # unused in math: seq_len==1 makes per-head softmax == 1 exactly
OUT_DIM = 512    # second MLP layer output (matches module)
LN_EPS = 1e-5    # nn.LayerNorm default


def image_encoder_kernel(x_ref, wvo_ref, b_attn_ref, gamma_ref, beta_ref,
                         w1_ref, b1_ref, w2_ref, b2_ref, out_ref):
    x = x_ref[...]                                   # (tb, D) f32, residual path stays f32
    xb = x.astype(jnp.bfloat16)                      # bf16 only for the MXU operand

    # Attention block collapsed (seq_len == 1): out_proj(V(x)) + residual, f32 accum.
    h = jnp.dot(xb, wvo_ref[...], preferred_element_type=jnp.float32)
    h = h + x + b_attn_ref[...]

    # Two-pass (centered) LayerNorm over the feature dim, f32.
    mu = jnp.mean(h, axis=-1, keepdims=True)
    d = h - mu
    var = jnp.mean(d * d, axis=-1, keepdims=True)
    ln = d * lax.rsqrt(var + LN_EPS) * gamma_ref[...] + beta_ref[...]

    # ReLU; dropout(p=0.3) is identity at inference time.
    # TODO(synk): training-mode dropout (stateful PRNG masking) not implemented.
    r = jnp.maximum(ln, 0.0)

    # MLP: Linear(D, D) -> ReLU -> Linear(D, 512) -> ReLU  (bf16 operands, f32 acc).
    m1 = jnp.dot(r.astype(jnp.bfloat16), w1_ref[...],
                 preferred_element_type=jnp.float32) + b1_ref[...]
    m1 = jnp.maximum(m1, 0.0)
    out = jnp.dot(m1.astype(jnp.bfloat16), w2_ref[...],
                  preferred_element_type=jnp.float32) + b2_ref[...]
    out = jnp.maximum(out, 0.0)

    out_ref[...] = out.astype(out_ref.dtype)


def image_encoder(x, kparams, *, tile_b=1024, out_dtype=jnp.bfloat16):
    """x: (B, DIM) float32. kparams: folded params from fold_params() (bf16 matmul weights)."""
    wvo, b_attn, gamma, beta, w1, b1, w2, b2 = kparams
    B, D = x.shape
    out_dim = w2.shape[1]

    # Batch tile: big (HBM-bound, bigger tiles -> closer to roofline), sublane-aligned,
    # and capped at ceil(B/2) so the grid keeps >= 2 steps for v7x's two TensorCores.
    half = ((-(-B // 2)) + 7) // 8 * 8
    tb = max(8, min(int(tile_b), half))
    nb = pl.cdiv(B, tb)          # partial edge block handled by Pallas (OOB writes masked)

    def full2d(arr):
        # block == full array extent; constant index_map (weights resident across grid)
        return pl.BlockSpec(arr.shape, lambda i: (0, 0))

    return pl.pallas_call(
        image_encoder_kernel,
        out_shape=jax.ShapeDtypeStruct((B, out_dim), out_dtype),
        grid_spec=pl.GridSpec(
            grid=(nb,),
            in_specs=[
                pl.BlockSpec((tb, D), lambda i: (i, 0)),   # x batch tile (f32, cast in kernel)
                full2d(wvo), full2d(b_attn),               # fused attn weight / bias
                full2d(gamma), full2d(beta),               # layernorm affine
                full2d(w1), full2d(b1),                    # MLP layer 1
                full2d(w2), full2d(b2),                    # MLP layer 2
            ],
            out_specs=pl.BlockSpec((tb, out_dim), lambda i: (i, 0)),
        ),
        compiler_params=pltpu.CompilerParams(dimension_semantics=("parallel",)),
    )(x, wvo, b_attn, gamma, beta, w1, b1, w2, b2)


def make_params(key, dim=DIM, out_dim=OUT_DIM):
    """f32 reference parameters, pre-transposed to (in, out) layout."""
    ks = jax.random.split(key, 8)
    scale = 0.05
    wv = scale * jax.random.normal(ks[0], (dim, dim), jnp.float32)
    bv = scale * jax.random.normal(ks[1], (1, dim), jnp.float32)
    wo = scale * jax.random.normal(ks[2], (dim, dim), jnp.float32)
    bo = scale * jax.random.normal(ks[3], (1, dim), jnp.float32)
    gamma = jnp.ones((1, dim), jnp.float32)
    beta = jnp.zeros((1, dim), jnp.float32)
    w1 = scale * jax.random.normal(ks[4], (dim, dim), jnp.float32)
    b1 = scale * jax.random.normal(ks[5], (1, dim), jnp.float32)
    w2 = scale * jax.random.normal(ks[6], (dim, out_dim), jnp.float32)
    b2 = scale * jax.random.normal(ks[7], (1, out_dim), jnp.float32)
    return (wv, bv, wo, bo, gamma, beta, w1, b1, w2, b2)


def fold_params(params):
    """Fold attention (Wv @ Wo) into one bf16 matmul weight; residual is added in f32 in-kernel."""
    wv, bv, wo, bo, gamma, beta, w1, b1, w2, b2 = params
    w_vo = (wv @ wo).astype(jnp.bfloat16)     # NO identity baked in (residual stays f32)
    b_attn = bv @ wo + bo                     # f32 bias
    return (w_vo, b_attn,
            gamma, beta,
            w1.astype(jnp.bfloat16), b1,
            w2.astype(jnp.bfloat16), b2)


def reference(x, params):
    """Pure-JAX f32 reference of the original (unfolded) forward pass."""
    wv, bv, wo, bo, gamma, beta, w1, b1, w2, b2 = params
    v = x @ wv + bv
    attn = v @ wo + bo
    h = attn + x
    mu = jnp.mean(h, axis=-1, keepdims=True)
    var = jnp.mean(jnp.square(h - mu), axis=-1, keepdims=True)
    ln = (h - mu) / jnp.sqrt(var + LN_EPS) * gamma + beta
    r = jnp.maximum(ln, 0.0)
    m1 = jnp.maximum(r @ w1 + b1, 0.0)
    return jnp.maximum(m1 @ w2 + b2, 0.0)


if __name__ == "__main__":
    key = jax.random.PRNGKey(0)
    kx, kp = jax.random.split(key)

    B = 512                      # tile cap -> tb=256, nb=2: both v7x TensorCores get work
    x = jax.random.normal(kx, (B, DIM), jnp.float32)
    params = make_params(kp)
    kparams = fold_params(params)

    out = image_encoder(x, kparams)
    out = jax.block_until_ready(out)
    assert out.shape == (B, OUT_DIM), out.shape

    ref = reference(x, params)
    out_f32 = out.astype(jnp.float32)
    # bf16 matmul operands / bf16 output; residual + LN kept f32 -> tightened tolerance
    assert jnp.allclose(out_f32, ref, rtol=2e-2, atol=2e-2), (
        "mismatch vs JAX reference, max abs err="
        + str(float(jnp.max(jnp.abs(out_f32 - ref)))))
    print("KERNEL_OK")
</pallas_src>

<mosaic_0001>
module attributes {stable_mosaic.version = 11 : i64} {
  func.func @image_encoder_kernel(%arg0: i32, %arg1: memref<256x128xf32, #tpu.memory_space<vmem>>, %arg2: memref<128x128xbf16, #tpu.memory_space<vmem>>, %arg3: memref<1x128xf32, #tpu.memory_space<vmem>>, %arg4: memref<1x128xf32, #tpu.memory_space<vmem>>, %arg5: memref<1x128xf32, #tpu.memory_space<vmem>>, %arg6: memref<128x128xbf16, #tpu.memory_space<vmem>>, %arg7: memref<1x128xf32, #tpu.memory_space<vmem>>, %arg8: memref<128x512xbf16, #tpu.memory_space<vmem>>, %arg9: memref<1x512xf32, #tpu.memory_space<vmem>>, %arg10: memref<256x512xbf16, #tpu.memory_space<vmem>>) attributes {dimension_semantics = [#tpu.dimension_semantics<parallel>], iteration_bounds = array<i64: 2>, scalar_prefetch = 0 : i64, scratch_operands = 0 : i64, tpu.core_type = #tpu.core_type<tc>, window_params = [{transform_indices = @transform_0, window_bounds = array<i64: 256, 128>}, {pipeline_mode = #tpu.pipeline_mode<synchronous>, transform_indices = @transform_1, window_bounds = array<i64: 128, 128>}, {pipeline_mode = #tpu.pipeline_mode<synchronous>, transform_indices = @transform_2, window_bounds = array<i64: 1, 128>}, {pipeline_mode = #tpu.pipeline_mode<synchronous>, transform_indices = @transform_3, window_bounds = array<i64: 1, 128>}, {pipeline_mode = #tpu.pipeline_mode<synchronous>, transform_indices = @transform_4, window_bounds = array<i64: 1, 128>}, {pipeline_mode = #tpu.pipeline_mode<synchronous>, transform_indices = @transform_5, window_bounds = array<i64: 128, 128>}, {pipeline_mode = #tpu.pipeline_mode<synchronous>, transform_indices = @transform_6, window_bounds = array<i64: 1, 128>}, {pipeline_mode = #tpu.pipeline_mode<synchronous>, transform_indices = @transform_7, window_bounds = array<i64: 128, 512>}, {pipeline_mode = #tpu.pipeline_mode<synchronous>, transform_indices = @transform_8, window_bounds = array<i64: 1, 512>}, {transform_indices = @transform_9, window_bounds = array<i64: 256, 512>}]} {
    %c0 = arith.constant 0 : index
    %c0_0 = arith.constant 0 : index
    %0 = vector.load %arg1[%c0, %c0_0] : memref<256x128xf32, #tpu.memory_space<vmem>>, vector<256x128xf32>
    %1 = arith.truncf %0 : vector<256x128xf32> to vector<256x128xbf16>
    %c0_1 = arith.constant 0 : index
    %c0_2 = arith.constant 0 : index
    %2 = vector.load %arg2[%c0_1, %c0_2] : memref<128x128xbf16, #tpu.memory_space<vmem>>, vector<128x128xbf16>
    %cst = arith.constant dense<0.000000e+00> : vector<256x128xf32>
    %3 = tpu.matmul %1, %2, %cst {dimension_numbers = #tpu.dot_dimension_numbers<[1], [0], [0], [1], [0, 0, 1, 1], [], []>} : vector<256x128xbf16>, vector<128x128xbf16>, vector<256x128xf32> -> vector<256x128xf32>
    %4 = arith.addf %3, %0 : vector<256x128xf32>
    %c0_3 = arith.constant 0 : index
    %c0_4 = arith.constant 0 : index
    %5 = vector.load %arg3[%c0_3, %c0_4] : memref<1x128xf32, #tpu.memory_space<vmem>>, vector<1x128xf32>
    %6 = vector.broadcast %5 : vector<1x128xf32> to vector<256x128xf32>
    %7 = arith.addf %4, %6 : vector<256x128xf32>
    %cst_5 = arith.constant dense<0.000000e+00> : vector<256xf32>
    %8 = vector.multi_reduction <add>, %7, %cst_5 [1] : vector<256x128xf32> to vector<256xf32>
    %9 = vector.shape_cast %8 : vector<256xf32> to vector<256x1xf32>
    %cst_6 = arith.constant 1.280000e+02 : f32
    %10 = vector.broadcast %cst_6 : f32 to vector<256x1xf32>
    %11 = arith.divf %9, %10 : vector<256x1xf32>
    %12 = vector.broadcast %11 : vector<256x1xf32> to vector<256x128xf32>
    %13 = arith.subf %7, %12 : vector<256x128xf32>
    %14 = arith.mulf %13, %13 : vector<256x128xf32>
    %cst_7 = arith.constant dense<0.000000e+00> : vector<256xf32>
    %15 = vector.multi_reduction <add>, %14, %cst_7 [1] : vector<256x128xf32> to vector<256xf32>
    %16 = vector.shape_cast %15 : vector<256xf32> to vector<256x1xf32>
    %cst_8 = arith.constant 1.280000e+02 : f32
    %17 = vector.broadcast %cst_8 : f32 to vector<256x1xf32>
    %18 = arith.divf %16, %17 : vector<256x1xf32>
    %cst_9 = arith.constant 9.99999974E-6 : f32
    %19 = vector.broadcast %cst_9 : f32 to vector<256x1xf32>
    %20 = arith.addf %18, %19 : vector<256x1xf32>
    %21 = math.rsqrt %20 : vector<256x1xf32>
    %22 = vector.broadcast %21 : vector<256x1xf32> to vector<256x128xf32>
    %23 = arith.mulf %13, %22 : vector<256x128xf32>
    %c0_10 = arith.constant 0 : index
    %c0_11 = arith.constant 0 : index
    %24 = vector.load %arg4[%c0_10, %c0_11] : memref<1x128xf32, #tpu.memory_space<vmem>>, vector<1x128xf32>
    %25 = vector.broadcast %24 : vector<1x128xf32> to vector<256x128xf32>
    %26 = arith.mulf %23, %25 : vector<256x128xf32>
    %c0_12 = arith.constant 0 : index
    %c0_13 = arith.constant 0 : index
    %27 = vector.load %arg5[%c0_12, %c0_13] : memref<1x128xf32, #tpu.memory_space<vmem>>, vector<1x128xf32>
    %28 = vector.broadcast %27 : vector<1x128xf32> to vector<256x128xf32>
    %29 = arith.addf %26, %28 : vector<256x128xf32>
    %cst_14 = arith.constant 0.000000e+00 : f32
    %30 = vector.broadcast %cst_14 : f32 to vector<256x128xf32>
    %31 = arith.maximumf %29, %30 : vector<256x128xf32>
    %32 = arith.truncf %31 : vector<256x128xf32> to vector<256x128xbf16>
    %c0_15 = arith.constant 0 : index
    %c0_16 = arith.constant 0 : index
    %33 = vector.load %arg6[%c0_15, %c0_16] : memref<128x128xbf16, #tpu.memory_space<vmem>>, vector<128x128xbf16>
    %cst_17 = arith.constant dense<0.000000e+00> : vector<256x128xf32>
    %34 = tpu.matmul %32, %33, %cst_17 {dimension_numbers = #tpu.dot_dimension_numbers<[1], [0], [0], [1], [0, 0, 1, 1], [], []>} : vector<256x128xbf16>, vector<128x128xbf16>, vector<256x128xf32> -> vector<256x128xf32>
    %c0_18 = arith.constant 0 : index
    %c0_19 = arith.constant 0 : index
    %35 = vector.load %arg7[%c0_18, %c0_19] : memref<1x128xf32, #tpu.memory_space<vmem>>, vector<1x128xf32>
    %36 = vector.broadcast %35 : vector<1x128xf32> to vector<256x128xf32>
    %37 = arith.addf %34, %36 : vector<256x128xf32>
    %cst_20 = arith.constant 0.000000e+00 : f32
    %38 = vector.broadcast %cst_20 : f32 to vector<256x128xf32>
    %39 = arith.maximumf %37, %38 : vector<256x128xf32>
    %40 = arith.truncf %39 : vector<256x128xf32> to vector<256x128xbf16>
    %c0_21 = arith.constant 0 : index
    %c0_22 = arith.constant 0 : index
    %41 = vector.load %arg8[%c0_21, %c0_22] : memref<128x512xbf16, #tpu.memory_space<vmem>>, vector<128x512xbf16>
    %cst_23 = arith.constant dense<0.000000e+00> : vector<256x512xf32>
    %42 = tpu.matmul %40, %41, %cst_23 {dimension_numbers = #tpu.dot_dimension_numbers<[1], [0], [0], [1], [0, 0, 1, 1], [], []>} : vector<256x128xbf16>, vector<128x512xbf16>, vector<256x512xf32> -> vector<256x512xf32>
    %c0_24 = arith.constant 0 : index
    %c0_25 = arith.constant 0 : index
    %43 = vector.load %arg9[%c0_24, %c0_25] : memref<1x512xf32, #tpu.memory_space<vmem>>, vector<1x512xf32>
    %44 = vector.broadcast %43 : vector<1x512xf32> to vector<256x512xf32>
    %45 = arith.addf %42, %44 : vector<256x512xf32>
    %cst_26 = arith.constant 0.000000e+00 : f32
    %46 = vector.broadcast %cst_26 : f32 to vector<256x512xf32>
    %47 = arith.maximumf %45, %46 : vector<256x512xf32>
    %48 = arith.truncf %47 : vector<256x512xf32> to vector<256x512xbf16>
    %c0_27 = arith.constant 0 : index
    %c0_28 = arith.constant 0 : index
    %49 = vector.load %arg10[%c0_27, %c0_28] : memref<256x512xbf16, #tpu.memory_space<vmem>>, vector<256x512xbf16>
    tpu.vector_store %arg10[%c0_27, %c0_28], %48 {strides = array<i32>} : memref<256x512xbf16, #tpu.memory_space<vmem>>, vector<256x512xbf16>,
    return
  }
  func.func @transform_0(%arg0: i32) -> (i32, i32) {
    %c0_i32 = arith.constant 0 : i32
    %c0_i32_0 = arith.constant 0 : i32
    return %arg0, %c0_i32 : i32, i32
  }
  func.func @transform_1(%arg0: i32) -> (i32, i32) {
    %c0_i32 = arith.constant 0 : i32
    %c0_i32_0 = arith.constant 0 : i32
    %c0_i32_1 = arith.constant 0 : i32
    return %c0_i32, %c0_i32_0 : i32, i32
  }
  func.func @transform_2(%arg0: i32) -> (i32, i32) {
    %c0_i32 = arith.constant 0 : i32
    %c0_i32_0 = arith.constant 0 : i32
    %c0_i32_1 = arith.constant 0 : i32
    return %c0_i32, %c0_i32_0 : i32, i32
  }
  func.func @transform_3(%arg0: i32) -> (i32, i32) {
    %c0_i32 = arith.constant 0 : i32
    %c0_i32_0 = arith.constant 0 : i32
    %c0_i32_1 = arith.constant 0 : i32
    return %c0_i32, %c0_i32_0 : i32, i32
  }
  func.func @transform_4(%arg0: i32) -> (i32, i32) {
    %c0_i32 = arith.constant 0 : i32
    %c0_i32_0 = arith.constant 0 : i32
    %c0_i32_1 = arith.constant 0 : i32
    return %c0_i32, %c0_i32_0 : i32, i32
  }
  func.func @transform_5(%arg0: i32) -> (i32, i32) {
    %c0_i32 = arith.constant 0 : i32
    %c0_i32_0 = arith.constant 0 : i32
    %c0_i32_1 = arith.constant 0 : i32
    return %c0_i32, %c0_i32_0 : i32, i32
  }
  func.func @transform_6(%arg0: i32) -> (i32, i32) {
    %c0_i32 = arith.constant 0 : i32
    %c0_i32_0 = arith.constant 0 : i32
    %c0_i32_1 = arith.constant 0 : i32
    return %c0_i32, %c0_i32_0 : i32, i32
  }
  func.func @transform_7(%arg0: i32) -> (i32, i32) {
    %c0_i32 = arith.constant 0 : i32
    %c0_i32_0 = arith.constant 0 : i32
    %c0_i32_1 = arith.constant 0 : i32
    return %c0_i32, %c0_i32_0 : i32, i32
  }
  func.func @transform_8(%arg0: i32) -> (i32, i32) {
    %c0_i32 = arith.constant 0 : i32
    %c0_i32_0 = arith.constant 0 : i32
    %c0_i32_1 = arith.constant 0 : i32
    return %c0_i32, %c0_i32_0 : i32, i32
  }
  func.func @transform_9(%arg0: i32) -> (i32, i32) {
    %c0_i32 = arith.constant 0 : i32
    %c0_i32_0 = arith.constant 0 : i32
    return %arg0, %c0_i32 : i32, i32
  }
}

</mosaic_0001>

<llo_original>
// kernel: tpu_custom_call.1
$region0: #{tpu_custom_call.1}
  #allocation0 [shape = 'u32[]', space=smem, size = 0x4, offset = 0x4, fixed_abs, tag = 'smem constant byte address 0x4 - core index']
  #allocation1 [shape = 'u32[144,128]{1,0:T(1,128)}', space=vmem, size = 0x12000, scoped, tag = 'internal scratch']
  %s0 = inlined_call_operand.hbm [shape: f32[512,128], index: 0, kind: input, shape index: {}]
  %s1 = inlined_call_operand.hbm [shape: bf16[128,128], index: 1, kind: input, shape index: {}]
  %s2 = inlined_call_operand.vmem [shape: f32[1,128], index: 2, kind: input, shape index: {}]
  %s3 = inlined_call_operand.vmem [shape: f32[1,128], index: 3, kind: input, shape index: {}]
  %s4 = inlined_call_operand.vmem [shape: f32[1,128], index: 4, kind: input, shape index: {}]
  %s5 = inlined_call_operand.hbm [shape: bf16[128,128], index: 5, kind: input, shape index: {}]
  %s6 = inlined_call_operand.vmem [shape: f32[1,128], index: 6, kind: input, shape index: {}]
  %s7 = inlined_call_operand.hbm [shape: bf16[128,512], index: 7, kind: input, shape index: {}]
  %s8 = inlined_call_operand.vmem [shape: f32[1,512], index: 8, kind: input, shape index: {}]
  %s9 = inlined_call_operand.hbm [shape: bf16[512,512], index: 9, kind: output, shape index: {}]
  %s10 = sld [smem:[#allocation0]]
  $region85: #{tpu_custom_call.1} parent=0
    _
  %s12 = ssub.s32 1, %s10
  %s13 = scalar_select 0, %s12, %s10
  $region1: #{tpu_custom_call.1} parent=0
    #allocation2 [shape = 'u8[262144]{0}', space=vmem, size = 0x40000, scoped, tag = 'input window, operand 0']
    #allocation3 [shape = 's32[2]{0}', space=sflag, size = 0x8, scoped, tag = 'scoped memory for tpu_custom_call.1']
    #allocation4 [shape = 's32[2]{0}', space=sflag, size = 0x8, scoped, tag = 'scoped memory for tpu_custom_call.1']
    #allocation5 [shape = 'u8[32768]{0}', space=vmem, size = 0x8000, scoped, tag = 'input window, operand 1, single buffered']
    #allocation6 [shape = 's32[1]{0}', space=sflag, size = 0x4, scoped, tag = 'scoped memory for tpu_custom_call.1']
    #allocation7 [shape = 'u8[32768]{0}', space=vmem, size = 0x8000, scoped, tag = 'input window, operand 5, single buffered']
    #allocation8 [shape = 'u8[131072]{0}', space=vmem, size = 0x20000, scoped, tag = 'input window, operand 7, single buffered']
    #allocation9 [shape = 's32[1]{0}', space=sflag, size = 0x4, scoped, tag = 'scoped memory for tpu_custom_call.1']
    #allocation10 [shape = 'u8[524288]{0}', space=vmem, size = 0x80000, scoped, tag = 'output window, operand 0']
    %14 = vsyncpa [#allocation3], 0
    %s15 = scalar_lea.sflag [#allocation3], 1
    %16 = vsyncpa %s15, 0
    %17 = vsyncpa [#allocation6], 0
    %18 = vsyncpa [#allocation9], 0
    %19 = vsyncpa [#allocation4], 0
    %s20 = scalar_lea.sflag [#allocation4], 1
    %21 = vsyncpa %s20, 0
    loop: start=0, step=1, limit=4
    $region2: #{tpu_custom_call.1} parent=1 // loop_pre_header
      _
    $region3: #{tpu_custom_call.1} parent=1 // loop_header
      %s23 = sphi 0, %s27
      %p24 = scmp.ge.s32.totalorder %s23, 4
      %s33 = sphi 0, %s35
      %s36 = sphi 0, %s33
      %s37 = sphi 0, %s36
      %s53 = sphi 0, %s37
      %s57 = sphi 0, %s57
      %s59 = sphi 0, %s57
      %s60 = sphi 0, %s59
      %s74 = sphi 0, %s60
      %s78 = sphi 0, %s78
      %s80 = sphi 0, %s78
      %s81 = sphi 0, %s80
      %s95 = sphi 0, %s81
      %s99 = sphi 0, %s99
      %s101 = sphi 0, %s99
      %s102 = sphi 0, %s101
      %s116 = sphi 0, %s102
      %s120 = sphi 0, %s120
      %s122 = sphi 0, %s120
      %s123 = sphi 0, %s122
      %s137 = sphi 0, %s123
      %s141 = sphi 0, %s141
      %s143 = sphi 0, %s141
      %s144 = sphi 0, %s143
      %s158 = sphi 0, %s144
      %s162 = sphi 0, %s162
      %s164 = sphi 0, %s162
      %s165 = sphi 0, %s164
      %s179 = sphi 0, %s165
      %s183 = sphi 0, %s183
      %s185 = sphi 0, %s183
      %s186 = sphi 0, %s185
      %s200 = sphi 0, %s186
      %s204 = sphi 0, %s204
      %s206 = sphi 0, %s204
      %s207 = sphi 0, %s206
      %s221 = sphi 0, %s207
      %s227 = sphi 0, %s229
      %s230 = sphi 0, %s227
      %s231 = sphi 0, %s230
      %s247 = sphi 0, %s231
    $region4: #{tpu_custom_call.1} parent=1 // loop_header_branch
      %26 = sbr.rel (%p24) target = $region8
    $region5: #{tpu_custom_call.1} parent=1 // loop_body
      %s28 = ssub.s32 %s23, 1
      %s29 = ssub.s32 %s23, 2
      %s30 = sadd.s32 %s23, 1
      %s31 = ssub.s32 %s23, %s30
      %p32 = scmp.eq.s32.totalorder %s31, 0
      %s34 = sadd.s32 %s33, 1
      %s35 = scalar_select %p32, %s33, %s34
      %p38 = pneg %p32
      %p39 = scmp.eq.s32.totalorder %s23, 1
      %p40 = por %p38, %p39
      %p41 = scmp.ne.s32.totalorder %s33, %s36
      %p42 = scmp.eq.s32.totalorder %s23, 0
      %p43 = por %p41, %p42
      %p44 = scmp.ne.s32.totalorder %s33, %s36
      %p45 = scmp.eq.s32.totalorder %s28, 1
      %p46 = por %p44, %p45
      %p47 = scmp.ne.s32.totalorder %s36, %s37
      %p48 = scmp.eq.s32.totalorder %s28, 0
      %p49 = por %p47, %p48
      %p50 = scmp.ne.s32.totalorder %s36, %s37
      %p51 = scmp.eq.s32.totalorder %s29, 1
      %p52 = por %p50, %p51
      %p54 = scmp.ne.s32.totalorder %s37, %s53
      %p55 = scmp.eq.s32.totalorder %s29, 0
      %p56 = por %p54, %p55
      %s58 = sadd.s32 %s57, 1
      %p61 = scmp.eq.s32.totalorder %s23, 1
      %p62 = scmp.ne.s32.totalorder %s57, %s59
      %p63 = scmp.eq.s32.totalorder %s23, 0
      %p64 = por %p62, %p63
      %p65 = scmp.ne.s32.totalorder %s57, %s59
      %p66 = scmp.eq.s32.totalorder %s28, 1
      %p67 = por %p65, %p66
      %p68 = scmp.ne.s32.totalorder %s59, %s60
      %p69 = scmp.eq.s32.totalorder %s28, 0
      %p70 = por %p68, %p69
      %p71 = scmp.ne.s32.totalorder %s59, %s60
      %p72 = scmp.eq.s32.totalorder %s29, 1
      %p73 = por %p71, %p72
      %p75 = scmp.ne.s32.totalorder %s60, %s74
      %p76 = scmp.eq.s32.totalorder %s29, 0
      %p77 = por %p75, %p76
      %s79 = sadd.s32 %s78, 1
      %p82 = scmp.eq.s32.totalorder %s23, 1
      %p83 = scmp.ne.s32.totalorder %s78, %s80
      %p84 = scmp.eq.s32.totalorder %s23, 0
      %p85 = por %p83, %p84
      %p86 = scmp.ne.s32.totalorder %s78, %s80
      %p87 = scmp.eq.s32.totalorder %s28, 1
      %p88 = por %p86, %p87
      %p89 = scmp.ne.s32.totalorder %s80, %s81
      %p90 = scmp.eq.s32.totalorder %s28, 0
      %p91 = por %p89, %p90
      %p92 = scmp.ne.s32.totalorder %s80, %s81
      %p93 = scmp.eq.s32.totalorder %s29, 1
      %p94 = por %p92, %p93
      %p96 = scmp.ne.s32.totalorder %s81, %s95
      %p97 = scmp.eq.s32.totalorder %s29, 0
      %p98 = por %p96, %p97
      %s100 = sadd.s32 %s99, 1
      %p103 = scmp.eq.s32.totalorder %s23, 1
      %p104 = scmp.ne.s32.totalorder %s99, %s101
      %p105 = scmp.eq.s32.totalorder %s23, 0
      %p106 = por %p104, %p105
      %p107 = scmp.ne.s32.totalorder %s99, %s101
      %p108 = scmp.eq.s32.totalorder %s28, 1
      %p109 = por %p107, %p108
      %p110 = scmp.ne.s32.totalorder %s101, %s102
      %p111 = scmp.eq.s32.totalorder %s28, 0
      %p112 = por %p110, %p111
      %p113 = scmp.ne.s32.totalorder %s101, %s102
      %p114 = scmp.eq.s32.totalorder %s29, 1
      %p115 = por %p113, %p114
      %p117 = scmp.ne.s32.totalorder %s102, %s116
      %p118 = scmp.eq.s32.totalorder %s29, 0
      %p119 = por %p117, %p118
      %s121 = sadd.s32 %s120, 1
      %p124 = scmp.eq.s32.totalorder %s23, 1
      %p125 = scmp.ne.s32.totalorder %s120, %s122
      %p126 = scmp.eq.s32.totalorder %s23, 0
      %p127 = por %p125, %p126
      %p128 = scmp.ne.s32.totalorder %s120, %s122
      %p129 = scmp.eq.s32.totalorder %s28, 1
      %p130 = por %p128, %p129
      %p131 = scmp.ne.s32.totalorder %s122, %s123
      %p132 = scmp.eq.s32.totalorder %s28, 0
      %p133 = por %p131, %p132
      %p134 = scmp.ne.s32.totalorder %s122, %s123
      %p135 = scmp.eq.s32.totalorder %s29, 1
      %p136 = por %p134, %p135
      %p138 = scmp.ne.s32.totalorder %s123, %s137
      %p139 = scmp.eq.s32.totalorder %s29, 0
      %p140 = por %p138, %p139
      %s142 = sadd.s32 %s141, 1
      %p145 = scmp.eq.s32.totalorder %s23, 1
      %p146 = scmp.ne.s32.totalorder %s141, %s143
      %p147 = scmp.eq.s32.totalorder %s23, 0
      %p148 = por %p146, %p147
      %p149 = scmp.ne.s32.totalorder %s141, %s143
      %p150 = scmp.eq.s32.totalorder %s28, 1
      %p151 = por %p149, %p150
      %p152 = scmp.ne.s32.totalorder %s143, %s144
      %p153 = scmp.eq.s32.totalorder %s28, 0
      %p154 = por %p152, %p153
      %p155 = scmp.ne.s32.totalorder %s143, %s144
      %p156 = scmp.eq.s32.totalorder %s29, 1
      %p157 = por %p155, %p156
      %p159 = scmp.ne.s32.totalorder %s144, %s158
      %p160 = scmp.eq.s32.totalorder %s29, 0
      %p161 = por %p159, %p160
      %s163 = sadd.s32 %s162, 1
      %p166 = scmp.eq.s32.totalorder %s23, 1
      %p167 = scmp.ne.s32.totalorder %s162, %s164
      %p168 = scmp.eq.s32.totalorder %s23, 0
      %p169 = por %p167, %p168
      %p170 = scmp.ne.s32.totalorder %s162, %s164
      %p171 = scmp.eq.s32.totalorder %s28, 1
      %p172 = por %p170, %p171
      %p173 = scmp.ne.s32.totalorder %s164, %s165
      %p174 = scmp.eq.s32.totalorder %s28, 0
      %p175 = por %p173, %p174
      %p176 = scmp.ne.s32.totalorder %s164, %s165
      %p177 = scmp.eq.s32.totalorder %s29, 1
      %p178 = por %p176, %p177
      %p180 = scmp.ne.s32.totalorder %s165, %s179
      %p181 = scmp.eq.s32.totalorder %s29, 0
      %p182 = por %p180, %p181
      %s184 = sadd.s32 %s183, 1
      %p187 = scmp.eq.s32.totalorder %s23, 1
      %p188 = scmp.ne.s32.totalorder %s183, %s185
      %p189 = scmp.eq.s32.totalorder %s23, 0
      %p190 = por %p188, %p189
      %p191 = scmp.ne.s32.totalorder %s183, %s185
      %p192 = scmp.eq.s32.totalorder %s28, 1
      %p193 = por %p191, %p192
      %p194 = scmp.ne.s32.totalorder %s185, %s186
      %p195 = scmp.eq.s32.totalorder %s28, 0
      %p196 = por %p194, %p195
      %p197 = scmp.ne.s32.totalorder %s185, %s186
      %p198 = scmp.eq.s32.totalorder %s29, 1
      %p199 = por %p197, %p198
      %p201 = scmp.ne.s32.totalorder %s186, %s200
      %p202 = scmp.eq.s32.totalorder %s29, 0
      %p203 = por %p201, %p202
      %s205 = sadd.s32 %s204, 1
      %p208 = scmp.eq.s32.totalorder %s23, 1
      %p209 = scmp.ne.s32.totalorder %s204, %s206
      %p210 = scmp.eq.s32.totalorder %s23, 0
      %p211 = por %p209, %p210
      %p212 = scmp.ne.s32.totalorder %s204, %s206
      %p213 = scmp.eq.s32.totalorder %s28, 1
      %p214 = por %p212, %p213
      %p215 = scmp.ne.s32.totalorder %s206, %s207
      %p216 = scmp.eq.s32.totalorder %s28, 0
      %p217 = por %p215, %p216
      %p218 = scmp.ne.s32.totalorder %s206, %s207
      %p219 = scmp.eq.s32.totalorder %s29, 1
      %p220 = por %p218, %p219
      %p222 = scmp.ne.s32.totalorder %s207, %s221
      %p223 = scmp.eq.s32.totalorder %s29, 0
      %p224 = por %p222, %p223
      %s225 = ssub.s32 %s23, %s30
      %p226 = scmp.eq.s32.totalorder %s225, 0
      %s228 = sadd.s32 %s227, 1
      %s229 = scalar_select %p226, %s227, %s228
      %p232 = pneg %p226
      %p233 = scmp.eq.s32.totalorder %s23, 1
      %p234 = por %p232, %p233
      %p235 = scmp.ne.s32.totalorder %s227, %s230
      %p236 = scmp.eq.s32.totalorder %s23, 0
      %p237 = por %p235, %p236
      %p238 = scmp.ne.s32.totalorder %s227, %s230
      %p239 = scmp.eq.s32.totalorder %s28, 1
      %p240 = por %p238, %p239
      %p241 = scmp.ne.s32.totalorder %s230, %s231
      %p242 = scmp.eq.s32.totalorder %s28, 0
      %p243 = por %p241, %p242
      %p244 = scmp.ne.s32.totalorder %s230, %s231
      %p245 = scmp.eq.s32.totalorder %s29, 1
      %p246 = por %p244, %p245
      %p248 = scmp.ne.s32.totalorder %s231, %s247
      %p249 = scmp.eq.s32.totalorder %s29, 0
      %p250 = por %p248, %p249
      %p251 = scmp.le.s32.totalorder 1, %s23
      %p252 = scmp.lt.s32.totalorder %s23, 3
      %p253 = pnand %p251, %p252
      %p254 = pneg %p253
      // Predicated region
      $region9: #{tpu_custom_call.1} parent=5 // pred_check
        _
      $region10: #{tpu_custom_call.1} parent=5 // pred_check_branch
        %256 = sbr.rel (%p253) target = $region12
      $region11: #{tpu_custom_call.1} parent=5 // pred_region
        %s257 = ssub.s32 %s23, 1
        // Predicated region
        $region13: #{tpu_custom_call.1} parent=11 // pred_check
          %p258 = pneg %p70
        $region14: #{tpu_custom_call.1} parent=11 // pred_check_branch
          %260 = sbr.rel (%p258) target = $region16
        $region15: #{tpu_custom_call.1} parent=11 // pred_region
          %s262 = ssub.s32 1024, 1024
          %263 = vsyncadd [#allocation6], %s262
          %s264 = sshll.u32 [#allocation5], 4
          %s265 = int_to_ptr.vmem [resolvable:$true] %s264
          %270 = dma.hbm_to_vmem [thread:$0]  %s1, 1024, %s265, [#allocation6], 64, 64, 4
        $region16: #{tpu_custom_call.1} parent=11 // pred_fallthru
          _
        // Predicated region
        $region17: #{tpu_custom_call.1} parent=11 // pred_check
          %p271 = pneg %p91
        $region18: #{tpu_custom_call.1} parent=11 // pred_check_branch
          %273 = sbr.rel (%p271) target = $region20
        $region19: #{tpu_custom_call.1} parent=11 // pred_region
          _
        $region20: #{tpu_custom_call.1} parent=11 // pred_fallthru
          _
        // Predicated region
        $region21: #{tpu_custom_call.1} parent=11 // pred_check
          %p274 = pneg %p112
        $region22: #{tpu_custom_call.1} parent=11 // pred_check_branch
          %276 = sbr.rel (%p274) target = $region24
        $region23: #{tpu_custom_call.1} parent=11 // pred_region
          _
        $region24: #{tpu_custom_call.1} parent=11 // pred_fallthru
          _
        // Predicated region
        $region25: #{tpu_custom_call.1} parent=11 // pred_check
          %p277 = pneg %p133
        $region26: #{tpu_custom_call.1} parent=11 // pred_check_branch
          %279 = sbr.rel (%p277) target = $region28
        $region27: #{tpu_custom_call.1} parent=11 // pred_region
          _
        $region28: #{tpu_custom_call.1} parent=11 // pred_fallthru
          _
        // Predicated region
        $region29: #{tpu_custom_call.1} parent=11 // pred_check
          %p280 = pneg %p154
        $region30: #{tpu_custom_call.1} parent=11 // pred_check_branch
          %282 = sbr.rel (%p280) target = $region32
        $region31: #{tpu_custom_call.1} parent=11 // pred_region
          %s284 = ssub.s32 1024, 1024
          %285 = vsyncadd [#allocation6], %s284
          %s286 = sshll.u32 [#allocation7], 4
          %s287 = int_to_ptr.vmem [resolvable:$true] %s286
          %292 = dma.hbm_to_vmem [thread:$0]  %s5, 1024, %s287, [#allocation6], 64, 64, 4
        $region32: #{tpu_custom_call.1} parent=11 // pred_fallthru
          _
        // Predicated region
        $region33: #{tpu_custom_call.1} parent=11 // pred_check
          %p293 = pneg %p175
        $region34: #{tpu_custom_call.1} parent=11 // pred_check_branch
          %295 = sbr.rel (%p293) target = $region36
        $region35: #{tpu_custom_call.1} parent=11 // pred_region
          _
        $region36: #{tpu_custom_call.1} parent=11 // pred_fallthru
          _
        // Predicated region
        $region37: #{tpu_custom_call.1} parent=11 // pred_check
          %p296 = pneg %p196
        $region38: #{tpu_custom_call.1} parent=11 // pred_check_branch
          %298 = sbr.rel (%p296) target = $region40
        $region39: #{tpu_custom_call.1} parent=11 // pred_region
          %s300 = ssub.s32 4096, 4096
          %301 = vsyncadd [#allocation9], %s300
          %s302 = sshll.u32 [#allocation8], 4
          %s303 = int_to_ptr.vmem [resolvable:$true] %s302
          %308 = dma.hbm_to_vmem [thread:$0]  %s7, 4096, %s303, [#allocation9], 256, 256, 16
        $region40: #{tpu_custom_call.1} parent=11 // pred_fallthru
          _
        // Predicated region
        $region41: #{tpu_custom_call.1} parent=11 // pred_check
          %p309 = pneg %p217
        $region42: #{tpu_custom_call.1} parent=11 // pred_check_branch
          %311 = sbr.rel (%p309) target = $region44
        $region43: #{tpu_custom_call.1} parent=11 // pred_region
          _
        $region44: #{tpu_custom_call.1} parent=11 // pred_fallthru
          _
      $region12: #{tpu_custom_call.1} parent=5 // pred_fallthru
        _
      %p312 = scmp.lt.s32.totalorder %s23, 2
      // Predicated region
      $region45: #{tpu_custom_call.1} parent=5 // pred_check
        %p313 = pneg %p312
      $region46: #{tpu_custom_call.1} parent=5 // pred_check_branch
        %315 = sbr.rel (%p313) target = $region48
      $region47: #{tpu_custom_call.1} parent=5 // pred_region
        // Predicated region
        $region49: #{tpu_custom_call.1} parent=47 // pred_check
          %p316 = pneg %p43
        $region50: #{tpu_custom_call.1} parent=47 // pred_check_branch
          %318 = sbr.rel (%p316) target = $region52
        $region51: #{tpu_custom_call.1} parent=47 // pred_region
          %s319 = sand.u32 %s33, 1
          %s320 = scalar_lea.sflag [#allocation3], %s319
          %s321 = sand.u32 %s33, 1
          %s322 = smul.addr %s321, 256
          %s323 = scalar_lea.vmem [#allocation2], %s322
          %s324 = smul.u32 32, %s23
          %s326 = ssub.s32 4096, 4096
          %327 = vsyncadd %s320, %s326
          %s328 = smul.addr %s324, 128
          %s329 = scalar_lea.hbm %s0, %s328
          %s330 = sshll.u32 %s323, 4
          %s331 = int_to_ptr.vmem [resolvable:$true] %s330
          %336 = dma.hbm_to_vmem [thread:$0]  %s329, 4096, %s331, %s320, 128, 128, 8
        $region52: #{tpu_custom_call.1} parent=47 // pred_fallthru
          _
      $region48: #{tpu_custom_call.1} parent=5 // pred_fallthru
        _
      %p337 = scmp.le.s32.totalorder 1, %s23
      %p338 = scmp.lt.s32.totalorder %s23, 3
      %p339 = pnand %p337, %p338
      %p340 = pneg %p339
      // Predicated region
      $region53: #{tpu_custom_call.1} parent=5 // pred_check
        _
      $region54: #{tpu_custom_call.1} parent=5 // pred_check_branch
        %342 = sbr.rel (%p339) target = $region56
      $region55: #{tpu_custom_call.1} parent=5 // pred_region
        %s343 = ssub.s32 %s23, 1
        %s344 = sand.u32 %s36, 1
        %s345 = scalar_lea.sflag [#allocation3], %s344
        %s346 = sand.u32 %s36, 1
        %s347 = smul.addr %s346, 256
        %s348 = scalar_lea.vmem [#allocation2], %s347
        // Predicated region
        $region57: #{tpu_custom_call.1} parent=55 // pred_check
          %p349 = pneg %p49
        $region58: #{tpu_custom_call.1} parent=55 // pred_check_branch
          %351 = sbr.rel (%p349) target = $region60
        $region59: #{tpu_custom_call.1} parent=55 // pred_region
          %352 = dma.done %s345, 4096
        $region60: #{tpu_custom_call.1} parent=55 // pred_fallthru
          _
        // Predicated region
        $region61: #{tpu_custom_call.1} parent=55 // pred_check
          %p353 = pneg %p70
        $region62: #{tpu_custom_call.1} parent=55 // pred_check_branch
          %355 = sbr.rel (%p353) target = $region64
        $region63: #{tpu_custom_call.1} parent=55 // pred_region
          %356 = dma.done [#allocation6], 1024
        $region64: #{tpu_custom_call.1} parent=55 // pred_fallthru
          _
        // Predicated region
        $region65: #{tpu_custom_call.1} parent=55 // pred_check
          %p357 = pneg %p154
        $region66: #{tpu_custom_call.1} parent=55 // pred_check_branch
          %359 = sbr.rel (%p357) target = $region68
        $region67: #{tpu_custom_call.1} parent=55 // pred_region
          %360 = dma.done [#allocation6], 1024
        $region68: #{tpu_custom_call.1} parent=55 // pred_fallthru
          _
        // Predicated region
        $region69: #{tpu_custom_call.1} parent=55 // pred_check
          %p361 = pneg %p196
        $region70: #{tpu_custom_call.1} parent=55 // pred_check_branch
          %363 = sbr.rel (%p361) target = $region72
        $region71: #{tpu_custom_call.1} parent=55 // pred_region
          %364 = dma.done [#allocation9], 4096
        $region72: #{tpu_custom_call.1} parent=55 // pred_fallthru
          _
        %s365 = sand.u32 %s36, 1
        %s366 = scalar_lea.sflag [#allocation3], %s365
        %s367 = sand.u32 %s36, 1
        %s368 = smul.addr %s367, 256
        %s369 = scalar_lea.vmem [#allocation2], %s368
        %p370 = pneg %p49
        %p371 = pneg %p46
        %p372 = pneg %p70
        %p373 = pneg %p67
        %p374 = pneg %p91
        %p375 = pneg %p88
        %p376 = pneg %p112
        %p377 = pneg %p109
        %p378 = pneg %p133
        %p379 = pneg %p130
        %p380 = pneg %p154
        %p381 = pneg %p151
        %p382 = pneg %p175
        %p383 = pneg %p172
        %p384 = pneg %p196
        %p385 = pneg %p193
        %p386 = pneg %p217
        %p387 = pneg %p214
        %p388 = pneg %p243
        %p389 = pneg %p240
        %s390 = sand.u32 %s230, 1
        %s391 = scalar_lea.sflag [#allocation4], %s390
        %s392 = sand.u32 %s230, 1
        %s393 = smul.addr %s392, 512
        %s394 = scalar_lea.vmem [#allocation10], %s393
        %s395 = smul.u32 32, %s28
        %s396 = smul.u32 32, %s28
        %v398 = vld [vmem:[%s348] sm:$0xff]
        %v399 = vld [vmem:[%s348 + $0x8] sm:$0xff]
        %v400 = vld [vmem:[%s348 + $0x10] sm:$0xff]
        %v401 = vld [vmem:[%s348 + $0x18] sm:$0xff]
        %v402 = vld [vmem:[%s348 + $0x20] sm:$0xff]
        %v403 = vld [vmem:[%s348 + $0x28] sm:$0xff]
        %v404 = vld [vmem:[%s348 + $0x30] sm:$0xff]
        %v405 = vld [vmem:[%s348 + $0x38] sm:$0xff]
        %v406 = vld [vmem:[%s348 + $0x40] sm:$0xff]
        %v407 = vld [vmem:[%s348 + $0x48] sm:$0xff]
        %v408 = vld [vmem:[%s348 + $0x50] sm:$0xff]
        %v409 = vld [vmem:[%s348 + $0x58] sm:$0xff]
        %v410 = vld [vmem:[%s348 + $0x60] sm:$0xff]
        %v411 = vld [vmem:[%s348 + $0x68] sm:$0xff]
        %v412 = vld [vmem:[%s348 + $0x70] sm:$0xff]
        %v413 = vld [vmem:[%s348 + $0x78] sm:$0xff]
        %v414 = vld [vmem:[%s348 + $0x80] sm:$0xff]
        %v415 = vld [vmem:[%s348 + $0x88] sm:$0xff]
        %v416 = vld [vmem:[%s348 + $0x90] sm:$0xff]
        %v417 = vld [vmem:[%s348 + $0x98] sm:$0xff]
        %v418 = vld [vmem:[%s348 + $0xa0] sm:$0xff]
        %v419 = vld [vmem:[%s348 + $0xa8] sm:$0xff]
        %v420 = vld [vmem:[%s348 + $0xb0] sm:$0xff]
        %v421 = vld [vmem:[%s348 + $0xb8] sm:$0xff]
        %v422 = vld [vmem:[%s348 + $0xc0] sm:$0xff]
        %v423 = vld [vmem:[%s348 + $0xc8] sm:$0xff]
        %v424 = vld [vmem:[%s348 + $0xd0] sm:$0xff]
        %v425 = vld [vmem:[%s348 + $0xd8] sm:$0xff]
        %v426 = vld [vmem:[%s348 + $0xe0] sm:$0xff]
        %v427 = vld [vmem:[%s348 + $0xe8] sm:$0xff]
        %v428 = vld [vmem:[%s348 + $0xf0] sm:$0xff]
        %v429 = vld [vmem:[%s348 + $0xf8] sm:$0xff]
        %v430 = vpack.c.bf16 %v399, %v398
        %v431 = vpack.c.bf16 %v401, %v400
        %v432 = vpack.c.bf16 %v403, %v402
        %v433 = vpack.c.bf16 %v405, %v404
        %v434 = vpack.c.bf16 %v407, %v406
        %v435 = vpack.c.bf16 %v409, %v408
        %v436 = vpack.c.bf16 %v411, %v410
        %v437 = vpack.c.bf16 %v413, %v412
        %v438 = vpack.c.bf16 %v415, %v414
        %v439 = vpack.c.bf16 %v417, %v416
        %v440 = vpack.c.bf16 %v419, %v418
        %v441 = vpack.c.bf16 %v421, %v420
        %v442 = vpack.c.bf16 %v423, %v422
        %v443 = vpack.c.bf16 %v425, %v424
        %v444 = vpack.c.bf16 %v427, %v426
        %v445 = vpack.c.bf16 %v429, %v428
        %v446 = vld [vmem:[#allocation5] sm:$0xf]
        %v447 = vld [vmem:[#allocation5 + $0x4] sm:$0xf]
        %v448 = vld [vmem:[#allocation5 + $0x8] sm:$0xf]
        %v449 = vld [vmem:[#allocation5 + $0xc] sm:$0xf]
        %v450 = vld [vmem:[#allocation5 + $0x10] sm:$0xf]
        %v451 = vld [vmem:[#allocation5 + $0x14] sm:$0xf]
        %v452 = vld [vmem:[#allocation5 + $0x18] sm:$0xf]
        %v453 = vld [vmem:[#allocation5 + $0x1c] sm:$0xf]
        %v454 = vld [vmem:[#allocation5 + $0x20] sm:$0xf]
        %v455 = vld [vmem:[#allocation5 + $0x24] sm:$0xf]
        %v456 = vld [vmem:[#allocation5 + $0x28] sm:$0xf]
        %v457 = vld [vmem:[#allocation5 + $0x2c] sm:$0xf]
        %v458 = vld [vmem:[#allocation5 + $0x30] sm:$0xf]
        %v459 = vld [vmem:[#allocation5 + $0x34] sm:$0xf]
        %v460 = vld [vmem:[#allocation5 + $0x38] sm:$0xf]
        %v461 = vld [vmem:[#allocation5 + $0x3c] sm:$0xf]
        %v478 = vunpack.c.l.b16 %v446
        %v479 = vunpack.c.l.b16 %v447
        %v480 = vunpack.c.l.b16 %v448
        %v481 = vunpack.c.l.b16 %v449
        %v482 = vunpack.c.l.b16 %v450
        %v483 = vunpack.c.l.b16 %v451
        %v484 = vunpack.c.l.b16 %v452
        %v485 = vunpack.c.l.b16 %v453
        %v486 = vunpack.c.l.b16 %v454
        %v487 = vunpack.c.l.b16 %v455
        %v488 = vunpack.c.l.b16 %v456
        %v489 = vunpack.c.l.b16 %v457
        %v490 = vunpack.c.l.b16 %v458
        %v491 = vunpack.c.l.b16 %v459
        %v492 = vunpack.c.l.b16 %v460
        %v493 = vunpack.c.l.b16 %v461
        %v494 = vpack.c.b16 %v479, %v478
        %v495 = vpack.c.b16 %v481, %v480
        %v496 = vpack.c.b16 %v483, %v482
        %v497 = vpack.c.b16 %v485, %v484
        %v498 = vpack.c.b16 %v487, %v486
        %v499 = vpack.c.b16 %v489, %v488
        %v500 = vpack.c.b16 %v491, %v490
        %v501 = vpack.c.b16 %v493, %v492
        %510 = vmatprep.subr.bf16.mxu0 0
        %511 = vmatpush1.bf16.msra.mxu0 %v494
        %512 = vmatprep.subr.bf16.mxu0 0
        %513 = vmatpush1.bf16.msra.mxu0 %v495
        %514 = vmatprep.subr.bf16.mxu0 0
        %515 = vmatpush1.bf16.msra.mxu0 %v496
        %516 = vmatprep.subr.bf16.mxu0 0
        %517 = vmatpush1.bf16.msra.mxu0 %v497
        %518 = vmatprep.subr.bf16.mxu0 0
        %519 = vmatpush1.bf16.msra.mxu0 %v498
        %520 = vmatprep.subr.bf16.mxu0 0
        %521 = vmatpush1.bf16.msra.mxu0 %v499
        %522 = vmatprep.subr.bf16.mxu0 0
        %523 = vmatpush1.bf16.msra.mxu0 %v500
        %524 = vmatprep.subr.bf16.mxu0 0
        %525 = vmatpush1.bf16.msra.mxu0 %v501
        %526 = vmatprep.subr.bf16.mxu0 0
        %527 = vmatpush1.bf16.msra.mxu0 0
        %528 = vmatprep.subr.bf16.mxu0 0
        %529 = vmatpush1.bf16.msra.mxu0 0
        %530 = vmatprep.subr.bf16.mxu0 0
        %531 = vmatpush1.bf16.msra.mxu0 0
        %532 = vmatprep.subr.bf16.mxu0 0
        %533 = vmatpush1.bf16.msra.mxu0 0
        %534 = vmatprep.subr.bf16.mxu0 0
        %535 = vmatpush1.bf16.msra.mxu0 0
        %536 = vmatprep.subr.bf16.mxu0 0
        %537 = vmatpush1.bf16.msra.mxu0 0
        %538 = vmatprep.subr.bf16.mxu0 0
        %539 = vmatpush1.bf16.msra.mxu0 0
        %540 = vmatprep.subr.bf16.mxu0 0
        %541 = vmatpush1.bf16.msra.mxu0 0
        %542 = vmatprep.mubr.bf16.mxu0 0
        %543 = vmatmul.mubr.bf16.gmra.mrb[0].mxu0 %v430
        %v544 = vpop.f32.mrb[0].mxu0
        %v545 = vadd.f32 %v398, %v544
        %v546 = vpop.f32.mrb[0].mxu0
        %v547 = vpop.f32.mrb[0].mxu0
        %v548 = vadd.f32 %v399, %v547
        %v549 = vpop.f32.mrb[0].mxu0
        %550 = vmatprep.mubr.bf16.mxu0 0
        %551 = vmatmul.mubr.bf16.gmra.mrb[0].mxu0 %v431
        %v552 = vpop.f32.mrb[0].mxu0
        %v553 = vadd.f32 %v400, %v552
        %v554 = vpop.f32.mrb[0].mxu0
        %v555 = vpop.f32.mrb[0].mxu0
        %v556 = vadd.f32 %v401, %v555
        %v557 = vpop.f32.mrb[0].mxu0
        %558 = vmatprep.mubr.bf16.mxu0 0
        %559 = vmatmul.mubr.bf16.gmra.mrb[0].mxu0 %v432
        %v560 = vpop.f32.mrb[0].mxu0
        %v561 = vadd.f32 %v402, %v560
        %v562 = vpop.f32.mrb[0].mxu0
        %v563 = vpop.f32.mrb[0].mxu0
        %v564 = vadd.f32 %v403, %v563
        %v565 = vpop.f32.mrb[0].mxu0
        %566 = vmatprep.mubr.bf16.mxu0 0
        %567 = vmatmul.mubr.bf16.gmra.mrb[0].mxu0 %v433
        %v568 = vpop.f32.mrb[0].mxu0
        %v569 = vadd.f32 %v404, %v568
        %v570 = vpop.f32.mrb[0].mxu0
        %v571 = vpop.f32.mrb[0].mxu0
        %v572 = vadd.f32 %v405, %v571
        %v573 = vpop.f32.mrb[0].mxu0
        %574 = vmatprep.mubr.bf16.mxu0 0
        %575 = vmatmul.mubr.bf16.gmra.mrb[0].mxu0 %v434
        %v576 = vpop.f32.mrb[0].mxu0
        %v577 = vadd.f32 %v406, %v576
        %v578 = vpop.f32.mrb[0].mxu0
        %v579 = vpop.f32.mrb[0].mxu0
        %v580 = vadd.f32 %v407, %v579
        %v581 = vpop.f32.mrb[0].mxu0
        %582 = vmatprep.mubr.bf16.mxu0 0
        %583 = vmatmul.mubr.bf16.gmra.mrb[0].mxu0 %v435
        %v584 = vpop.f32.mrb[0].mxu0
        %v585 = vadd.f32 %v408, %v584
        %v586 = vpop.f32.mrb[0].mxu0
        %v587 = vpop.f32.mrb[0].mxu0
        %v588 = vadd.f32 %v409, %v587
        %v589 = vpop.f32.mrb[0].mxu0
        %590 = vmatprep.mubr.bf16.mxu0 0
        %591 = vmatmul.mubr.bf16.gmra.mrb[0].mxu0 %v436
        %v592 = vpop.f32.mrb[0].mxu0
        %v593 = vadd.f32 %v410, %v592
        %v594 = vpop.f32.mrb[0].mxu0
        %v595 = vpop.f32.mrb[0].mxu0
        %v596 = vadd.f32 %v411, %v595
        %v597 = vpop.f32.mrb[0].mxu0
        %598 = vmatprep.mubr.bf16.mxu0 0
        %599 = vmatmul.mubr.bf16.gmra.mrb[0].mxu0 %v437
        %v600 = vpop.f32.mrb[0].mxu0
        %v601 = vadd.f32 %v412, %v600
        %v602 = vpop.f32.mrb[0].mxu0
        %v603 = vpop.f32.mrb[0].mxu0
        %v604 = vadd.f32 %v413, %v603
        %v605 = vpop.f32.mrb[0].mxu0
        %606 = vmatprep.mubr.bf16.mxu0 0
        %607 = vmatmul.mubr.bf16.gmra.mrb[0].mxu0 %v438
        %v608 = vpop.f32.mrb[0].mxu0
        %v609 = vadd.f32 %v414, %v608
        %v610 = vpop.f32.mrb[0].mxu0
        %v611 = vpop.f32.mrb[0].mxu0
        %v612 = vadd.f32 %v415, %v611
        %v613 = vpop.f32.mrb[0].mxu0
        %614 = vmatprep.mubr.bf16.mxu0 0
        %615 = vmatmul.mubr.bf16.gmra.mrb[0].mxu0 %v439
        %v616 = vpop.f32.mrb[0].mxu0
        %v617 = vadd.f32 %v416, %v616
        %v618 = vpop.f32.mrb[0].mxu0
        %v619 = vpop.f32.mrb[0].mxu0
        %v620 = vadd.f32 %v417, %v619
        %v621 = vpop.f32.mrb[0].mxu0
        %622 = vmatprep.mubr.bf16.mxu0 0
        %623 = vmatmul.mubr.bf16.gmra.mrb[0].mxu0 %v440
        %v624 = vpop.f32.mrb[0].mxu0
        %v625 = vadd.f32 %v418, %v624
        %v626 = vpop.f32.mrb[0].mxu0
        %v627 = vpop.f32.mrb[0].mxu0
        %v628 = vadd.f32 %v419, %v627
        %v629 = vpop.f32.mrb[0].mxu0
        %630 = vmatprep.mubr.bf16.mxu0 0
        %631 = vmatmul.mubr.bf16.gmra.mrb[0].mxu0 %v441
        %v632 = vpop.f32.mrb[0].mxu0
        %v633 = vadd.f32 %v420, %v632
        %v634 = vpop.f32.mrb[0].mxu0
        %v635 = vpop.f32.mrb[0].mxu0
        %v636 = vadd.f32 %v421, %v635
        %v637 = vpop.f32.mrb[0].mxu0
        %638 = vmatprep.mubr.bf16.mxu0 0
        %639 = vmatmul.mubr.bf16.gmra.mrb[0].mxu0 %v442
        %v640 = vpop.f32.mrb[0].mxu0
        %v641 = vadd.f32 %v422, %v640
        %v642 = vpop.f32.mrb[0].mxu0
        %v643 = vpop.f32.mrb[0].mxu0
        %v644 = vadd.f32 %v423, %v643
        %v645 = vpop.f32.mrb[0].mxu0
        %646 = vmatprep.mubr.bf16.mxu0 0
        %647 = vmatmul.mubr.bf16.gmra.mrb[0].mxu0 %v443
        %v648 = vpop.f32.mrb[0].mxu0
        %v649 = vadd.f32 %v424, %v648
        %v650 = vpop.f32.mrb[0].mxu0
        %v651 = vpop.f32.mrb[0].mxu0
        %v652 = vadd.f32 %v425, %v651
        %v653 = vpop.f32.mrb[0].mxu0
        %654 = vmatprep.mubr.bf16.mxu0 0
        %655 = vmatmul.mubr.bf16.gmra.mrb[0].mxu0 %v444
        %v656 = vpop.f32.mrb[0].mxu0
        %v657 = vadd.f32 %v426, %v656
        %v658 = vpop.f32.mrb[0].mxu0
        %v659 = vpop.f32.mrb[0].mxu0
        %v660 = vadd.f32 %v427, %v659
        %v661 = vpop.f32.mrb[0].mxu0
        %662 = vmatprep.mubr.bf16.mxu0 0
        %663 = vmatmul.mubr.bf16.gmra.mrb[0].mxu0 %v445
        %v664 = vpop.f32.mrb[0].mxu0
        %v665 = vadd.f32 %v428, %v664
        %v666 = vpop.f32.mrb[0].mxu0
        %v667 = vpop.f32.mrb[0].mxu0
        %v668 = vadd.f32 %v429, %v667
        %v669 = vpop.f32.mrb[0].mxu0
        %670 = vdwg.mxu0
        %v671 = vld [vmem:[%s2] sm:$0x1]
        %v673 = vlaneseq
        %v674 = vshrl.u32 %v673, 7
        %v675 = vsub.s32 0, %v674
        %v676 = vrot.slane %v671, %v675
        %v678 = vadd.f32 %v545, %v676
        %v679 = vadd.f32 %v548, %v676
        %v680 = vadd.f32 %v553, %v676
        %v681 = vadd.f32 %v556, %v676
        %v682 = vadd.f32 %v561, %v676
        %v683 = vadd.f32 %v564, %v676
        %v684 = vadd.f32 %v569, %v676
        %v685 = vadd.f32 %v572, %v676
        %v686 = vadd.f32 %v577, %v676
        %v687 = vadd.f32 %v580, %v676
        %v688 = vadd.f32 %v585, %v676
        %v689 = vadd.f32 %v588, %v676
        %v690 = vadd.f32 %v593, %v676
        %v691 = vadd.f32 %v596, %v676
        %v692 = vadd.f32 %v601, %v676
        %v693 = vadd.f32 %v604, %v676
        %v694 = vadd.f32 %v609, %v676
        %v695 = vadd.f32 %v612, %v676
        %v696 = vadd.f32 %v617, %v676
        %v697 = vadd.f32 %v620, %v676
        %v698 = vadd.f32 %v625, %v676
        %v699 = vadd.f32 %v628, %v676
        %v700 = vadd.f32 %v633, %v676
        %v701 = vadd.f32 %v636, %v676
        %v702 = vadd.f32 %v641, %v676
        %v703 = vadd.f32 %v644, %v676
        %v704 = vadd.f32 %v649, %v676
        %v705 = vadd.f32 %v652, %v676
        %v706 = vadd.f32 %v657, %v676
        %v707 = vadd.f32 %v660, %v676
        %v708 = vadd.f32 %v665, %v676
        %v709 = vadd.f32 %v668, %v676
        %710 = vadd.xlane.f32.xlu0 %v678
        %v711 = vpop.xlane.xlu0 %710
        %712 = vadd.xlane.f32.xlu0 %v679
        %v713 = vpop.xlane.xlu0 %712
        %714 = vadd.xlane.f32.xlu0 %v680
        %v715 = vpop.xlane.xlu0 %714
        %716 = vadd.xlane.f32.xlu0 %v681
        %v717 = vpop.xlane.xlu0 %716
        %718 = vadd.xlane.f32.xlu0 %v682
        %v719 = vpop.xlane.xlu0 %718
        %720 = vadd.xlane.f32.xlu0 %v683
        %v721 = vpop.xlane.xlu0 %720
        %722 = vadd.xlane.f32.xlu0 %v684
        %v723 = vpop.xlane.xlu0 %722
        %724 = vadd.xlane.f32.xlu0 %v685
        %v725 = vpop.xlane.xlu0 %724
        %726 = vadd.xlane.f32.xlu0 %v686
        %v727 = vpop.xlane.xlu0 %726
        %728 = vadd.xlane.f32.xlu0 %v687
        %v729 = vpop.xlane.xlu0 %728
        %730 = vadd.xlane.f32.xlu0 %v688
        %v731 = vpop.xlane.xlu0 %730
        %732 = vadd.xlane.f32.xlu0 %v689
        %v733 = vpop.xlane.xlu0 %732
        %734 = vadd.xlane.f32.xlu0 %v690
        %v735 = vpop.xlane.xlu0 %734
        %736 = vadd.xlane.f32.xlu0 %v691
        %v737 = vpop.xlane.xlu0 %736
        %738 = vadd.xlane.f32.xlu0 %v692
        %v739 = vpop.xlane.xlu0 %738
        %740 = vadd.xlane.f32.xlu0 %v693
        %v741 = vpop.xlane.xlu0 %740
        %742 = vadd.xlane.f32.xlu0 %v694
        %v743 = vpop.xlane.xlu0 %742
        %744 = vadd.xlane.f32.xlu0 %v695
        %v745 = vpop.xlane.xlu0 %744
        %746 = vadd.xlane.f32.xlu0 %v696
        %v747 = vpop.xlane.xlu0 %746
        %748 = vadd.xlane.f32.xlu0 %v697
        %v749 = vpop.xlane.xlu0 %748
        %750 = vadd.xlane.f32.xlu0 %v698
        %v751 = vpop.xlane.xlu0 %750
        %752 = vadd.xlane.f32.xlu0 %v699
        %v753 = vpop.xlane.xlu0 %752
        %754 = vadd.xlane.f32.xlu0 %v700
        %v755 = vpop.xlane.xlu0 %754
        %756 = vadd.xlane.f32.xlu0 %v701
        %v757 = vpop.xlane.xlu0 %756
        %758 = vadd.xlane.f32.xlu0 %v702
        %v759 = vpop.xlane.xlu0 %758
        %760 = vadd.xlane.f32.xlu0 %v703
        %v761 = vpop.xlane.xlu0 %760
        %762 = vadd.xlane.f32.xlu0 %v704
        %v763 = vpop.xlane.xlu0 %762
        %764 = vadd.xlane.f32.xlu0 %v705
        %v765 = vpop.xlane.xlu0 %764
        %766 = vadd.xlane.f32.xlu0 %v706
        %v767 = vpop.xlane.xlu0 %766
        %768 = vadd.xlane.f32.xlu0 %v707
        %v769 = vpop.xlane.xlu0 %768
        %770 = vadd.xlane.f32.xlu0 %v708
        %v771 = vpop.xlane.xlu0 %770
        %772 = vadd.xlane.f32.xlu0 %v709
        %v773 = vpop.xlane.xlu0 %772
        %v774 = vrcp.pop 128.0
        %v775 = vmul.f32 %v711, %v774
        %v776 = vmul.f32 %v713, %v774
        %v777 = vmul.f32 %v715, %v774
        %v778 = vmul.f32 %v717, %v774
        %v779 = vmul.f32 %v719, %v774
        %v780 = vmul.f32 %v721, %v774
        %v781 = vmul.f32 %v723, %v774
        %v782 = vmul.f32 %v725, %v774
        %v783 = vmul.f32 %v727, %v774
        %v784 = vmul.f32 %v729, %v774
        %v785 = vmul.f32 %v731, %v774
        %v786 = vmul.f32 %v733, %v774
        %v787 = vmul.f32 %v735, %v774
        %v788 = vmul.f32 %v737, %v774
        %v789 = vmul.f32 %v739, %v774
        %v790 = vmul.f32 %v741, %v774
        %v791 = vmul.f32 %v743, %v774
        %v792 = vmul.f32 %v745, %v774
        %v793 = vmul.f32 %v747, %v774
        %v794 = vmul.f32 %v749, %v774
        %v795 = vmul.f32 %v751, %v774
        %v796 = vmul.f32 %v753, %v774
        %v797 = vmul.f32 %v755, %v774
        %v798 = vmul.f32 %v757, %v774
        %v799 = vmul.f32 %v759, %v774
        %v800 = vmul.f32 %v761, %v774
        %v801 = vmul.f32 %v763, %v774
        %v802 = vmul.f32 %v765, %v774
        %v803 = vmul.f32 %v767, %v774
        %v804 = vmul.f32 %v769, %v774
        %v805 = vmul.f32 %v771, %v774
        %v806 = vmul.f32 %v773, %v774
        %v807 = vsub.f32 %v678, %v775
        %v808 = vsub.f32 %v679, %v776
        %v809 = vsub.f32 %v680, %v777
        %v810 = vsub.f32 %v681, %v778
        %v811 = vsub.f32 %v682, %v779
        %v812 = vsub.f32 %v683, %v780
        %v813 = vsub.f32 %v684, %v781
        %v814 = vsub.f32 %v685, %v782
        %v815 = vsub.f32 %v686, %v783
        %v816 = vsub.f32 %v687, %v784
        %v817 = vsub.f32 %v688, %v785
        %v818 = vsub.f32 %v689, %v786
        %v819 = vsub.f32 %v690, %v787
        %v820 = vsub.f32 %v691, %v788
        %v821 = vsub.f32 %v692, %v789
        %v822 = vsub.f32 %v693, %v790
        %v823 = vsub.f32 %v694, %v791
        %v824 = vsub.f32 %v695, %v792
        %v825 = vsub.f32 %v696, %v793
        %v826 = vsub.f32 %v697, %v794
        %v827 = vsub.f32 %v698, %v795
        %v828 = vsub.f32 %v699, %v796
        %v829 = vsub.f32 %v700, %v797
        %v830 = vsub.f32 %v701, %v798
        %v831 = vsub.f32 %v702, %v799
        %v832 = vsub.f32 %v703, %v800
        %v833 = vsub.f32 %v704, %v801
        %v834 = vsub.f32 %v705, %v802
        %v835 = vsub.f32 %v706, %v803
        %v836 = vsub.f32 %v707, %v804
        %v837 = vsub.f32 %v708, %v805
        %v838 = vsub.f32 %v709, %v806
        %v839 = vmul.f32 %v807, %v807
        %v840 = vmul.f32 %v808, %v808
        %v841 = vmul.f32 %v809, %v809
        %v842 = vmul.f32 %v810, %v810
        %v843 = vmul.f32 %v811, %v811
        %v844 = vmul.f32 %v812, %v812
        %v845 = vmul.f32 %v813, %v813
        %v846 = vmul.f32 %v814, %v814
        %v847 = vmul.f32 %v815, %v815
        %v848 = vmul.f32 %v816, %v816
        %v849 = vmul.f32 %v817, %v817
        %v850 = vmul.f32 %v818, %v818
        %v851 = vmul.f32 %v819, %v819
        %v852 = vmul.f32 %v820, %v820
        %v853 = vmul.f32 %v821, %v821
        %v854 = vmul.f32 %v822, %v822
        %v855 = vmul.f32 %v823, %v823
        %v856 = vmul.f32 %v824, %v824
        %v857 = vmul.f32 %v825, %v825
        %v858 = vmul.f32 %v826, %v826
        %v859 = vmul.f32 %v827, %v827
        %v860 = vmul.f32 %v828, %v828
        %v861 = vmul.f32 %v829, %v829
        %v862 = vmul.f32 %v830, %v830
        %v863 = vmul.f32 %v831, %v831
        %v864 = vmul.f32 %v832, %v832
        %v865 = vmul.f32 %v833, %v833
        %v866 = vmul.f32 %v834, %v834
        %v867 = vmul.f32 %v835, %v835
        %v868 = vmul.f32 %v836, %v836
        %v869 = vmul.f32 %v837, %v837
        %v870 = vmul.f32 %v838, %v838
        %871 = vadd.xlane.f32.xlu0 %v839
        %v872 = vpop.xlane.xlu0 %871
        %873 = vadd.xlane.f32.xlu0 %v840
        %v874 = vpop.xlane.xlu0 %873
        %875 = vadd.xlane.f32.xlu0 %v841
        %v876 = vpop.xlane.xlu0 %875
        %877 = vadd.xlane.f32.xlu0 %v842
        %v878 = vpop.xlane.xlu0 %877
        %879 = vadd.xlane.f32.xlu0 %v843
        %v880 = vpop.xlane.xlu0 %879
        %881 = vadd.xlane.f32.xlu0 %v844
        %v882 = vpop.xlane.xlu0 %881
        %883 = vadd.xlane.f32.xlu0 %v845
        %v884 = vpop.xlane.xlu0 %883
        %885 = vadd.xlane.f32.xlu0 %v846
        %v886 = vpop.xlane.xlu0 %885
        %887 = vadd.xlane.f32.xlu0 %v847
        %v888 = vpop.xlane.xlu0 %887
        %889 = vadd.xlane.f32.xlu0 %v848
        %v890 = vpop.xlane.xlu0 %889
        %891 = vadd.xlane.f32.xlu0 %v849
        %v892 = vpop.xlane.xlu0 %891
        %893 = vadd.xlane.f32.xlu0 %v850
        %v894 = vpop.xlane.xlu0 %893
        %895 = vadd.xlane.f32.xlu0 %v851
        %v896 = vpop.xlane.xlu0 %895
        %897 = vadd.xlane.f32.xlu0 %v852
        %v898 = vpop.xlane.xlu0 %897
        %899 = vadd.xlane.f32.xlu0 %v853
        %v900 = vpop.xlane.xlu0 %899
        %901 = vadd.xlane.f32.xlu0 %v854
        %v902 = vpop.xlane.xlu0 %901
        %903 = vadd.xlane.f32.xlu0 %v855
        %v904 = vpop.xlane.xlu0 %903
        %905 = vadd.xlane.f32.xlu0 %v856
        %v906 = vpop.xlane.xlu0 %905
        %907 = vadd.xlane.f32.xlu0 %v857
        %v908 = vpop.xlane.xlu0 %907
        %909 = vadd.xlane.f32.xlu0 %v858
        %v910 = vpop.xlane.xlu0 %909
        %911 = vadd.xlane.f32.xlu0 %v859
        %v912 = vpop.xlane.xlu0 %911
        %913 = vadd.xlane.f32.xlu0 %v860
        %v914 = vpop.xlane.xlu0 %913
        %915 = vadd.xlane.f32.xlu0 %v861
        %v916 = vpop.xlane.xlu0 %915
        %917 = vadd.xlane.f32.xlu0 %v862
        %v918 = vpop.xlane.xlu0 %917
        %919 = vadd.xlane.f32.xlu0 %v863
        %v920 = vpop.xlane.xlu0 %919
        %921 = vadd.xlane.f32.xlu0 %v864
        %v922 = vpop.xlane.xlu0 %921
        %923 = vadd.xlane.f32.xlu0 %v865
        %v924 = vpop.xlane.xlu0 %923
        %925 = vadd.xlane.f32.xlu0 %v866
        %v926 = vpop.xlane.xlu0 %925
        %927 = vadd.xlane.f32.xlu0 %v867
        %v928 = vpop.xlane.xlu0 %927
        %929 = vadd.xlane.f32.xlu0 %v868
        %v930 = vpop.xlane.xlu0 %929
        %931 = vadd.xlane.f32.xlu0 %v869
        %v932 = vpop.xlane.xlu0 %931
        %933 = vadd.xlane.f32.xlu0 %v870
        %v934 = vpop.xlane.xlu0 %933
        %v935 = vmul.f32 %v872, %v774
        %v936 = vmul.f32 %v874, %v774
        %v937 = vmul.f32 %v876, %v774
        %v938 = vmul.f32 %v878, %v774
        %v939 = vmul.f32 %v880, %v774
        %v940 = vmul.f32 %v882, %v774
        %v941 = vmul.f32 %v884, %v774
        %v942 = vmul.f32 %v886, %v774
        %v943 = vmul.f32 %v888, %v774
        %v944 = vmul.f32 %v890, %v774
        %v945 = vmul.f32 %v892, %v774
        %v946 = vmul.f32 %v894, %v774
        %v947 = vmul.f32 %v896, %v774
        %v948 = vmul.f32 %v898, %v774
        %v949 = vmul.f32 %v900, %v774
        %v950 = vmul.f32 %v902, %v774
        %v951 = vmul.f32 %v904, %v774
        %v952 = vmul.f32 %v906, %v774
        %v953 = vmul.f32 %v908, %v774
        %v954 = vmul.f32 %v910, %v774
        %v955 = vmul.f32 %v912, %v774
        %v956 = vmul.f32 %v914, %v774
        %v957 = vmul.f32 %v916, %v774
        %v958 = vmul.f32 %v918, %v774
        %v959 = vmul.f32 %v920, %v774
        %v960 = vmul.f32 %v922, %v774
        %v961 = vmul.f32 %v924, %v774
        %v962 = vmul.f32 %v926, %v774
        %v963 = vmul.f32 %v928, %v774
        %v964 = vmul.f32 %v930, %v774
        %v965 = vmul.f32 %v932, %v774
        %v966 = vmul.f32 %v934, %v774
        %v967 = vadd.f32 %v935, 1e-05
        %v968 = vadd.f32 %v936, 1e-05
        %v969 = vadd.f32 %v937, 1e-05
        %v970 = vadd.f32 %v938, 1e-05
        %v971 = vadd.f32 %v939, 1e-05
        %v972 = vadd.f32 %v940, 1e-05
        %v973 = vadd.f32 %v941, 1e-05
        %v974 = vadd.f32 %v942, 1e-05
        %v975 = vadd.f32 %v943, 1e-05
        %v976 = vadd.f32 %v944, 1e-05
        %v977 = vadd.f32 %v945, 1e-05
        %v978 = vadd.f32 %v946, 1e-05
        %v979 = vadd.f32 %v947, 1e-05
        %v980 = vadd.f32 %v948, 1e-05
        %v981 = vadd.f32 %v949, 1e-05
        %v982 = vadd.f32 %v950, 1e-05
        %v983 = vadd.f32 %v951, 1e-05
        %v984 = vadd.f32 %v952, 1e-05
        %v985 = vadd.f32 %v953, 1e-05
        %v986 = vadd.f32 %v954, 1e-05
        %v987 = vadd.f32 %v955, 1e-05
        %v988 = vadd.f32 %v956, 1e-05
        %v989 = vadd.f32 %v957, 1e-05
        %v990 = vadd.f32 %v958, 1e-05
        %v991 = vadd.f32 %v959, 1e-05
        %v992 = vadd.f32 %v960, 1e-05
        %v993 = vadd.f32 %v961, 1e-05
        %v994 = vadd.f32 %v962, 1e-05
        %v995 = vadd.f32 %v963, 1e-05
        %v996 = vadd.f32 %v964, 1e-05
        %v997 = vadd.f32 %v965, 1e-05
        %v998 = vadd.f32 %v966, 1e-05
        %v999 = vrsqrt.pop %v967
        %v1000 = vrsqrt.pop %v968
        %v1001 = vrsqrt.pop %v969
        %v1002 = vrsqrt.pop %v970
        %v1003 = vrsqrt.pop %v971
        %v1004 = vrsqrt.pop %v972
        %v1005 = vrsqrt.pop %v973
        %v1006 = vrsqrt.pop %v974
        %v1007 = vrsqrt.pop %v975
        %v1008 = vrsqrt.pop %v976
        %v1009 = vrsqrt.pop %v977
        %v1010 = vrsqrt.pop %v978
        %v1011 = vrsqrt.pop %v979
        %v1012 = vrsqrt.pop %v980
        %v1013 = vrsqrt.pop %v981
        %v1014 = vrsqrt.pop %v982
        %v1015 = vrsqrt.pop %v983
        %v1016 = vrsqrt.pop %v984
        %v1017 = vrsqrt.pop %v985
        %v1018 = vrsqrt.pop %v986
        %v1019 = vrsqrt.pop %v987
        %v1020 = vrsqrt.pop %v988
        %v1021 = vrsqrt.pop %v989
        %v1022 = vrsqrt.pop %v990
        %v1023 = vrsqrt.pop %v991
        %v1024 = vrsqrt.pop %v992
        %v1025 = vrsqrt.pop %v993
        %v1026 = vrsqrt.pop %v994
        %v1027 = vrsqrt.pop %v995
        %v1028 = vrsqrt.pop %v996
        %v1029 = vrsqrt.pop %v997
        %v1030 = vrsqrt.pop %v998
        %v1031 = vmul.f32 %v807, %v999
        %v1032 = vmul.f32 %v808, %v1000
        %v1033 = vmul.f32 %v809, %v1001
        %v1034 = vmul.f32 %v810, %v1002
        %v1035 = vmul.f32 %v811, %v1003
        %v1036 = vmul.f32 %v812, %v1004
        %v1037 = vmul.f32 %v813, %v1005
        %v1038 = vmul.f32 %v814, %v1006
        %v1039 = vmul.f32 %v815, %v1007
        %v1040 = vmul.f32 %v816, %v1008
        %v1041 = vmul.f32 %v817, %v1009
        %v1042 = vmul.f32 %v818, %v1010
        %v1043 = vmul.f32 %v819, %v1011
        %v1044 = vmul.f32 %v820, %v1012
        %v1045 = vmul.f32 %v821, %v1013
        %v1046 = vmul.f32 %v822, %v1014
        %v1047 = vmul.f32 %v823, %v1015
        %v1048 = vmul.f32 %v824, %v1016
        %v1049 = vmul.f32 %v825, %v1017
        %v1050 = vmul.f32 %v826, %v1018
        %v1051 = vmul.f32 %v827, %v1019
        %v1052 = vmul.f32 %v828, %v1020
        %v1053 = vmul.f32 %v829, %v1021
        %v1054 = vmul.f32 %v830, %v1022
        %v1055 = vmul.f32 %v831, %v1023
        %v1056 = vmul.f32 %v832, %v1024
        %v1057 = vmul.f32 %v833, %v1025
        %v1058 = vmul.f32 %v834, %v1026
        %v1059 = vmul.f32 %v835, %v1027
        %v1060 = vmul.f32 %v836, %v1028
        %v1061 = vmul.f32 %v837, %v1029
        %v1062 = vmul.f32 %v838, %v1030
        %v1063 = vld [vmem:[%s3] sm:$0x1]
        %v1065 = vlaneseq
        %v1066 = vshrl.u32 %v1065, 7
        %v1067 = vsub.s32 0, %v1066
        %v1068 = vrot.slane %v1063, %v1067
        %v1070 = vmul.f32 %v1031, %v1068
        %v1071 = vmul.f32 %v1032, %v1068
        %v1072 = vmul.f32 %v1033, %v1068
        %v1073 = vmul.f32 %v1034, %v1068
        %v1074 = vmul.f32 %v1035, %v1068
        %v1075 = vmul.f32 %v1036, %v1068
        %v1076 = vmul.f32 %v1037, %v1068
        %v1077 = vmul.f32 %v1038, %v1068
        %v1078 = vmul.f32 %v1039, %v1068
        %v1079 = vmul.f32 %v1040, %v1068
        %v1080 = vmul.f32 %v1041, %v1068
        %v1081 = vmul.f32 %v1042, %v1068
        %v1082 = vmul.f32 %v1043, %v1068
        %v1083 = vmul.f32 %v1044, %v1068
        %v1084 = vmul.f32 %v1045, %v1068
        %v1085 = vmul.f32 %v1046, %v1068
        %v1086 = vmul.f32 %v1047, %v1068
        %v1087 = vmul.f32 %v1048, %v1068
        %v1088 = vmul.f32 %v1049, %v1068
        %v1089 = vmul.f32 %v1050, %v1068
        %v1090 = vmul.f32 %v1051, %v1068
        %v1091 = vmul.f32 %v1052, %v1068
        %v1092 = vmul.f32 %v1053, %v1068
        %v1093 = vmul.f32 %v1054, %v1068
        %v1094 = vmul.f32 %v1055, %v1068
        %v1095 = vmul.f32 %v1056, %v1068
        %v1096 = vmul.f32 %v1057, %v1068
        %v1097 = vmul.f32 %v1058, %v1068
        %v1098 = vmul.f32 %v1059, %v1068
        %v1099 = vmul.f32 %v1060, %v1068
        %v1100 = vmul.f32 %v1061, %v1068
        %v1101 = vmul.f32 %v1062, %v1068
        %v1102 = vld [vmem:[%s4] sm:$0x1]
        %v1104 = vlaneseq
        %v1105 = vshrl.u32 %v1104, 7
        %v1106 = vsub.s32 0, %v1105
        %v1107 = vrot.slane %v1102, %v1106
        %v1109 = vadd.f32 %v1070, %v1107
        %v1110 = vadd.f32 %v1071, %v1107
        %v1111 = vadd.f32 %v1072, %v1107
        %v1112 = vadd.f32 %v1073, %v1107
        %v1113 = vadd.f32 %v1074, %v1107
        %v1114 = vadd.f32 %v1075, %v1107
        %v1115 = vadd.f32 %v1076, %v1107
        %v1116 = vadd.f32 %v1077, %v1107
        %v1117 = vadd.f32 %v1078, %v1107
        %v1118 = vadd.f32 %v1079, %v1107
        %v1119 = vadd.f32 %v1080, %v1107
        %v1120 = vadd.f32 %v1081, %v1107
        %v1121 = vadd.f32 %v1082, %v1107
        %v1122 = vadd.f32 %v1083, %v1107
        %v1123 = vadd.f32 %v1084, %v1107
        %v1124 = vadd.f32 %v1085, %v1107
        %v1125 = vadd.f32 %v1086, %v1107
        %v1126 = vadd.f32 %v1087, %v1107
        %v1127 = vadd.f32 %v1088, %v1107
        %v1128 = vadd.f32 %v1089, %v1107
        %v1129 = vadd.f32 %v1090, %v1107
        %v1130 = vadd.f32 %v1091, %v1107
        %v1131 = vadd.f32 %v1092, %v1107
        %v1132 = vadd.f32 %v1093, %v1107
        %v1133 = vadd.f32 %v1094, %v1107
        %v1134 = vadd.f32 %v1095, %v1107
        %v1135 = vadd.f32 %v1096, %v1107
        %v1136 = vadd.f32 %v1097, %v1107
        %v1137 = vadd.f32 %v1098, %v1107
        %v1138 = vadd.f32 %v1099, %v1107
        %v1139 = vadd.f32 %v1100, %v1107
        %v1140 = vadd.f32 %v1101, %v1107
        %v1141 = vmax.f32 %v1109, 0.0
        %v1142 = vmax.f32 %v1110, 0.0
        %v1143 = vmax.f32 %v1111, 0.0
        %v1144 = vmax.f32 %v1112, 0.0
        %v1145 = vmax.f32 %v1113, 0.0
        %v1146 = vmax.f32 %v1114, 0.0
        %v1147 = vmax.f32 %v1115, 0.0
        %v1148 = vmax.f32 %v1116, 0.0
        %v1149 = vmax.f32 %v1117, 0.0
        %v1150 = vmax.f32 %v1118, 0.0
        %v1151 = vmax.f32 %v1119, 0.0
        %v1152 = vmax.f32 %v1120, 0.0
        %v1153 = vmax.f32 %v1121, 0.0
        %v1154 = vmax.f32 %v1122, 0.0
        %v1155 = vmax.f32 %v1123, 0.0
        %v1156 = vmax.f32 %v1124, 0.0
        %v1157 = vmax.f32 %v1125, 0.0
        %v1158 = vmax.f32 %v1126, 0.0
        %v1159 = vmax.f32 %v1127, 0.0
        %v1160 = vmax.f32 %v1128, 0.0
        %v1161 = vmax.f32 %v1129, 0.0
        %v1162 = vmax.f32 %v1130, 0.0
        %v1163 = vmax.f32 %v1131, 0.0
        %v1164 = vmax.f32 %v1132, 0.0
        %v1165 = vmax.f32 %v1133, 0.0
        %v1166 = vmax.f32 %v1134, 0.0
        %v1167 = vmax.f32 %v1135, 0.0
        %v1168 = vmax.f32 %v1136, 0.0
        %v1169 = vmax.f32 %v1137, 0.0
        %v1170 = vmax.f32 %v1138, 0.0
        %v1171 = vmax.f32 %v1139, 0.0
        %v1172 = vmax.f32 %v1140, 0.0
        %v1173 = vpack.c.bf16 %v1142, %v1141
        %v1174 = vpack.c.bf16 %v1144, %v1143
        %v1175 = vpack.c.bf16 %v1146, %v1145
        %v1176 = vpack.c.bf16 %v1148, %v1147
        %v1177 = vpack.c.bf16 %v1150, %v1149
        %v1178 = vpack.c.bf16 %v1152, %v1151
        %v1179 = vpack.c.bf16 %v1154, %v1153
        %v1180 = vpack.c.bf16 %v1156, %v1155
        %v1181 = vpack.c.bf16 %v1158, %v1157
        %v1182 = vpack.c.bf16 %v1160, %v1159
        %v1183 = vpack.c.bf16 %v1162, %v1161
        %v1184 = vpack.c.bf16 %v1164, %v1163
        %v1185 = vpack.c.bf16 %v1166, %v1165
        %v1186 = vpack.c.bf16 %v1168, %v1167
        %v1187 = vpack.c.bf16 %v1170, %v1169
        %v1188 = vpack.c.bf16 %v1172, %v1171
        %v1189 = vld [vmem:[#allocation7] sm:$0xf]
        %v1190 = vld [vmem:[#allocation7 + $0x4] sm:$0xf]
        %v1191 = vld [vmem:[#allocation7 + $0x8] sm:$0xf]
        %v1192 = vld [vmem:[#allocation7 + $0xc] sm:$0xf]
        %v1193 = vld [vmem:[#allocation7 + $0x10] sm:$0xf]
        %v1194 = vld [vmem:[#allocation7 + $0x14] sm:$0xf]
        %v1195 = vld [vmem:[#allocation7 + $0x18] sm:$0xf]
        %v1196 = vld [vmem:[#allocation7 + $0x1c] sm:$0xf]
        %v1197 = vld [vmem:[#allocation7 + $0x20] sm:$0xf]
        %v1198 = vld [vmem:[#allocation7 + $0x24] sm:$0xf]
        %v1199 = vld [vmem:[#allocation7 + $0x28] sm:$0xf]
        %v1200 = vld [vmem:[#allocation7 + $0x2c] sm:$0xf]
        %v1201 = vld [vmem:[#allocation7 + $0x30] sm:$0xf]
        %v1202 = vld [vmem:[#allocation7 + $0x34] sm:$0xf]
        %v1203 = vld [vmem:[#allocation7 + $0x38] sm:$0xf]
        %v1204 = vld [vmem:[#allocation7 + $0x3c] sm:$0xf]
        %v1205 = vld [vmem:[%s6] sm:$0x1]
        %v1207 = vlaneseq
        %v1208 = vshrl.u32 %v1207, 7
        %v1209 = vsub.s32 0, %v1208
        %v1210 = vrot.slane %v1205, %v1209
        %v1228 = vunpack.c.l.b16 %v1189
        %v1229 = vunpack.c.l.b16 %v1190
        %v1230 = vunpack.c.l.b16 %v1191
        %v1231 = vunpack.c.l.b16 %v1192
        %v1232 = vunpack.c.l.b16 %v1193
        %v1233 = vunpack.c.l.b16 %v1194
        %v1234 = vunpack.c.l.b16 %v1195
        %v1235 = vunpack.c.l.b16 %v1196
        %v1236 = vunpack.c.l.b16 %v1197
        %v1237 = vunpack.c.l.b16 %v1198
        %v1238 = vunpack.c.l.b16 %v1199
        %v1239 = vunpack.c.l.b16 %v1200
        %v1240 = vunpack.c.l.b16 %v1201
        %v1241 = vunpack.c.l.b16 %v1202
        %v1242 = vunpack.c.l.b16 %v1203
        %v1243 = vunpack.c.l.b16 %v1204
        %v1244 = vpack.c.b16 %v1229, %v1228
        %v1245 = vpack.c.b16 %v1231, %v1230
        %v1246 = vpack.c.b16 %v1233, %v1232
        %v1247 = vpack.c.b16 %v1235, %v1234
        %v1248 = vpack.c.b16 %v1237, %v1236
        %v1249 = vpack.c.b16 %v1239, %v1238
        %v1250 = vpack.c.b16 %v1241, %v1240
        %v1251 = vpack.c.b16 %v1243, %v1242
        %1260 = vmatprep.subr.bf16.mxu0 0
        %1261 = vmatpush1.bf16.msra.mxu0 %v1244
        %1262 = vmatprep.subr.bf16.mxu0 0
        %1263 = vmatpush1.bf16.msra.mxu0 %v1245
        %1264 = vmatprep.subr.bf16.mxu0 0
        %1265 = vmatpush1.bf16.msra.mxu0 %v1246
        %1266 = vmatprep.subr.bf16.mxu0 0
        %1267 = vmatpush1.bf16.msra.mxu0 %v1247
        %1268 = vmatprep.subr.bf16.mxu0 0
        %1269 = vmatpush1.bf16.msra.mxu0 %v1248
        %1270 = vmatprep.subr.bf16.mxu0 0
        %1271 = vmatpush1.bf16.msra.mxu0 %v1249
        %1272 = vmatprep.subr.bf16.mxu0 0
        %1273 = vmatpush1.bf16.msra.mxu0 %v1250
        %1274 = vmatprep.subr.bf16.mxu0 0
        %1275 = vmatpush1.bf16.msra.mxu0 %v1251
        %1276 = vmatprep.subr.bf16.mxu0 0
        %1277 = vmatpush1.bf16.msra.mxu0 0
        %1278 = vmatprep.subr.bf16.mxu0 0
        %1279 = vmatpush1.bf16.msra.mxu0 0
        %1280 = vmatprep.subr.bf16.mxu0 0
        %1281 = vmatpush1.bf16.msra.mxu0 0
        %1282 = vmatprep.subr.bf16.mxu0 0
        %1283 = vmatpush1.bf16.msra.mxu0 0
        %1284 = vmatprep.subr.bf16.mxu0 0
        %1285 = vmatpush1.bf16.msra.mxu0 0
        %1286 = vmatprep.subr.bf16.mxu0 0
        %1287 = vmatpush1.bf16.msra.mxu0 0
        %1288 = vmatprep.subr.bf16.mxu0 0
        %1289 = vmatpush1.bf16.msra.mxu0 0
        %1290 = vmatprep.subr.bf16.mxu0 0
        %1291 = vmatpush1.bf16.msra.mxu0 0
        %1292 = vmatprep.mubr.bf16.mxu0 0
        %1293 = vmatmul.mubr.bf16.gmra.mrb[0].mxu0 %v1173
        %v1294 = vpop.f32.mrb[0].mxu0
        %v1295 = vadd.f32 %v1210, %v1294
        %v1296 = vpop.f32.mrb[0].mxu0
        %v1297 = vpop.f32.mrb[0].mxu0
        %v1298 = vadd.f32 %v1210, %v1297
        %v1299 = vpop.f32.mrb[0].mxu0
        %1300 = vmatprep.mubr.bf16.mxu0 0
        %1301 = vmatmul.mubr.bf16.gmra.mrb[0].mxu0 %v1174
        %v1302 = vpop.f32.mrb[0].mxu0
        %v1303 = vadd.f32 %v1210, %v1302
        %v1304 = vpop.f32.mrb[0].mxu0
        %v1305 = vpop.f32.mrb[0].mxu0
        %v1306 = vadd.f32 %v1210, %v1305
        %v1307 = vpop.f32.mrb[0].mxu0
        %1308 = vmatprep.mubr.bf16.mxu0 0
        %1309 = vmatmul.mubr.bf16.gmra.mrb[0].mxu0 %v1175
        %v1310 = vpop.f32.mrb[0].mxu0
        %v1311 = vadd.f32 %v1210, %v1310
        %v1312 = vpop.f32.mrb[0].mxu0
        %v1313 = vpop.f32.mrb[0].mxu0
        %v1314 = vadd.f32 %v1210, %v1313
        %v1315 = vpop.f32.mrb[0].mxu0
        %1316 = vmatprep.mubr.bf16.mxu0 0
        %1317 = vmatmul.mubr.bf16.gmra.mrb[0].mxu0 %v1176
        %v1318 = vpop.f32.mrb[0].mxu0
        %v1319 = vadd.f32 %v1210, %v1318
        %v1320 = vpop.f32.mrb[0].mxu0
        %v1321 = vpop.f32.mrb[0].mxu0
        %v1322 = vadd.f32 %v1210, %v1321
        %v1323 = vpop.f32.mrb[0].mxu0
        %1324 = vmatprep.mubr.bf16.mxu0 0
        %1325 = vmatmul.mubr.bf16.gmra.mrb[0].mxu0 %v1177
        %v1326 = vpop.f32.mrb[0].mxu0
        %v1327 = vadd.f32 %v1210, %v1326
        %v1328 = vpop.f32.mrb[0].mxu0
        %v1329 = vpop.f32.mrb[0].mxu0
        %v1330 = vadd.f32 %v1210, %v1329
        %v1331 = vpop.f32.mrb[0].mxu0
        %1332 = vmatprep.mubr.bf16.mxu0 0
        %1333 = vmatmul.mubr.bf16.gmra.mrb[0].mxu0 %v1178
        %v1334 = vpop.f32.mrb[0].mxu0
        %v1335 = vadd.f32 %v1210, %v1334
        %v1336 = vpop.f32.mrb[0].mxu0
        %v1337 = vpop.f32.mrb[0].mxu0
        %v1338 = vadd.f32 %v1210, %v1337
        %v1339 = vpop.f32.mrb[0].mxu0
        %1340 = vmatprep.mubr.bf16.mxu0 0
        %1341 = vmatmul.mubr.bf16.gmra.mrb[0].mxu0 %v1179
        %v1342 = vpop.f32.mrb[0].mxu0
        %v1343 = vadd.f32 %v1210, %v1342
        %v1344 = vpop.f32.mrb[0].mxu0
        %v1345 = vpop.f32.mrb[0].mxu0
        %v1346 = vadd.f32 %v1210, %v1345
        %v1347 = vpop.f32.mrb[0].mxu0
        %1348 = vmatprep.mubr.bf16.mxu0 0
        %1349 = vmatmul.mubr.bf16.gmra.mrb[0].mxu0 %v1180
        %v1350 = vpop.f32.mrb[0].mxu0
        %v1351 = vadd.f32 %v1210, %v1350
        %v1352 = vpop.f32.mrb[0].mxu0
        %v1353 = vpop.f32.mrb[0].mxu0
        %v1354 = vadd.f32 %v1210, %v1353
        %v1355 = vpop.f32.mrb[0].mxu0
        %1356 = vmatprep.mubr.bf16.mxu0 0
        %1357 = vmatmul.mubr.bf16.gmra.mrb[0].mxu0 %v1181
        %v1358 = vpop.f32.mrb[0].mxu0
        %v1359 = vadd.f32 %v1210, %v1358
        %v1360 = vpop.f32.mrb[0].mxu0
        %v1361 = vpop.f32.mrb[0].mxu0
        %v1362 = vadd.f32 %v1210, %v1361
        %v1363 = vpop.f32.mrb[0].mxu0
        %1364 = vmatprep.mubr.bf16.mxu0 0
        %1365 = vmatmul.mubr.bf16.gmra.mrb[0].mxu0 %v1182
        %v1366 = vpop.f32.mrb[0].mxu0
        %v1367 = vadd.f32 %v1210, %v1366
        %v1368 = vpop.f32.mrb[0].mxu0
        %v1369 = vpop.f32.mrb[0].mxu0
        %v1370 = vadd.f32 %v1210, %v1369
        %v1371 = vpop.f32.mrb[0].mxu0
        %1372 = vmatprep.mubr.bf16.mxu0 0
        %1373 = vmatmul.mubr.bf16.gmra.mrb[0].mxu0 %v1183
        %v1374 = vpop.f32.mrb[0].mxu0
        %v1375 = vadd.f32 %v1210, %v1374
        %v1376 = vpop.f32.mrb[0].mxu0
        %v1377 = vpop.f32.mrb[0].mxu0
        %v1378 = vadd.f32 %v1210, %v1377
        %v1379 = vpop.f32.mrb[0].mxu0
        %1380 = vmatprep.mubr.bf16.mxu0 0
        %1381 = vmatmul.mubr.bf16.gmra.mrb[0].mxu0 %v1184
        %v1382 = vpop.f32.mrb[0].mxu0
        %v1383 = vadd.f32 %v1210, %v1382
        %v1384 = vpop.f32.mrb[0].mxu0
        %v1385 = vpop.f32.mrb[0].mxu0
        %v1386 = vadd.f32 %v1210, %v1385
        %v1387 = vpop.f32.mrb[0].mxu0
        %1388 = vmatprep.mubr.bf16.mxu0 0
        %1389 = vmatmul.mubr.bf16.gmra.mrb[0].mxu0 %v1185
        %v1390 = vpop.f32.mrb[0].mxu0
        %v1391 = vadd.f32 %v1210, %v1390
        %v1392 = vpop.f32.mrb[0].mxu0
        %v1393 = vpop.f32.mrb[0].mxu0
        %v1394 = vadd.f32 %v1210, %v1393
        %v1395 = vpop.f32.mrb[0].mxu0
        %1396 = vmatprep.mubr.bf16.mxu0 0
        %1397 = vmatmul.mubr.bf16.gmra.mrb[0].mxu0 %v1186
        %v1398 = vpop.f32.mrb[0].mxu0
        %v1399 = vadd.f32 %v1210, %v1398
        %v1400 = vpop.f32.mrb[0].mxu0
        %v1401 = vpop.f32.mrb[0].mxu0
        %v1402 = vadd.f32 %v1210, %v1401
        %v1403 = vpop.f32.mrb[0].mxu0
        %1404 = vmatprep.mubr.bf16.mxu0 0
        %1405 = vmatmul.mubr.bf16.gmra.mrb[0].mxu0 %v1187
        %v1406 = vpop.f32.mrb[0].mxu0
        %v1407 = vadd.f32 %v1210, %v1406
        %v1408 = vpop.f32.mrb[0].mxu0
        %v1409 = vpop.f32.mrb[0].mxu0
        %v1410 = vadd.f32 %v1210, %v1409
        %v1411 = vpop.f32.mrb[0].mxu0
        %1412 = vmatprep.mubr.bf16.mxu0 0
        %1413 = vmatmul.mubr.bf16.gmra.mrb[0].mxu0 %v1188
        %v1414 = vpop.f32.mrb[0].mxu0
        %v1415 = vadd.f32 %v1210, %v1414
        %v1416 = vpop.f32.mrb[0].mxu0
        %v1417 = vpop.f32.mrb[0].mxu0
        %v1418 = vadd.f32 %v1210, %v1417
        %v1419 = vpop.f32.mrb[0].mxu0
        %1420 = vdwg.mxu0
        %v1421 = vmax.f32 %v1295, 0.0
        %v1422 = vmax.f32 %v1298, 0.0
        %v1423 = vmax.f32 %v1303, 0.0
        %v1424 = vmax.f32 %v1306, 0.0
        %v1425 = vmax.f32 %v1311, 0.0
        %v1426 = vmax.f32 %v1314, 0.0
        %v1427 = vmax.f32 %v1319, 0.0
        %v1428 = vmax.f32 %v1322, 0.0
        %v1429 = vmax.f32 %v1327, 0.0
        %v1430 = vmax.f32 %v1330, 0.0
        %v1431 = vmax.f32 %v1335, 0.0
        %v1432 = vmax.f32 %v1338, 0.0
        %v1433 = vmax.f32 %v1343, 0.0
        %v1434 = vmax.f32 %v1346, 0.0
        %v1435 = vmax.f32 %v1351, 0.0
        %v1436 = vmax.f32 %v1354, 0.0
        %v1437 = vmax.f32 %v1359, 0.0
        %v1438 = vmax.f32 %v1362, 0.0
        %v1439 = vmax.f32 %v1367, 0.0
        %v1440 = vmax.f32 %v1370, 0.0
        %v1441 = vmax.f32 %v1375, 0.0
        %v1442 = vmax.f32 %v1378, 0.0
        %v1443 = vmax.f32 %v1383, 0.0
        %v1444 = vmax.f32 %v1386, 0.0
        %v1445 = vmax.f32 %v1391, 0.0
        %v1446 = vmax.f32 %v1394, 0.0
        %v1447 = vmax.f32 %v1399, 0.0
        %v1448 = vmax.f32 %v1402, 0.0
        %v1449 = vmax.f32 %v1407, 0.0
        %v1450 = vmax.f32 %v1410, 0.0
        %v1451 = vmax.f32 %v1415, 0.0
        %v1452 = vmax.f32 %v1418, 0.0
        %v1453 = vpack.c.bf16 %v1422, %v1421
        %v1454 = vpack.c.bf16 %v1424, %v1423
        %v1455 = vpack.c.bf16 %v1426, %v1425
        %v1456 = vpack.c.bf16 %v1428, %v1427
        %v1457 = vpack.c.bf16 %v1430, %v1429
        %v1458 = vpack.c.bf16 %v1432, %v1431
        %v1459 = vpack.c.bf16 %v1434, %v1433
        %v1460 = vpack.c.bf16 %v1436, %v1435
        %v1461 = vpack.c.bf16 %v1438, %v1437
        %v1462 = vpack.c.bf16 %v1440, %v1439
        %v1463 = vpack.c.bf16 %v1442, %v1441
        %v1464 = vpack.c.bf16 %v1444, %v1443
        %v1465 = vpack.c.bf16 %v1446, %v1445
        %v1466 = vpack.c.bf16 %v1448, %v1447
        %v1467 = vpack.c.bf16 %v1450, %v1449
        %v1468 = vpack.c.bf16 %v1452, %v1451
        %v1469 = vld [vmem:[#allocation8] sm:$0xff]
        %v1470 = vld [vmem:[#allocation8 + $0x8] sm:$0xff]
        %v1471 = vld [vmem:[#allocation8 + $0x10] sm:$0xff]
        %v1472 = vld [vmem:[#allocation8 + $0x18] sm:$0xff]
        %v1473 = vld [vmem:[#allocation8 + $0x20] sm:$0xff]
        %v1474 = vld [vmem:[#allocation8 + $0x28] sm:$0xff]
        %v1475 = vld [vmem:[#allocation8 + $0x30] sm:$0xff]
        %v1476 = vld [vmem:[#allocation8 + $0x38] sm:$0xff]
        %v1477 = vld [vmem:[#allocation8 + $0x40] sm:$0xff]
        %v1478 = vld [vmem:[#allocation8 + $0x48] sm:$0xff]
        %v1479 = vld [vmem:[#allocation8 + $0x50] sm:$0xff]
        %v1480 = vld [vmem:[#allocation8 + $0x58] sm:$0xff]
        %v1481 = vld [vmem:[#allocation8 + $0x60] sm:$0xff]
        %v1482 = vld [vmem:[#allocation8 + $0x68] sm:$0xff]
        %v1483 = vld [vmem:[#allocation8 + $0x70] sm:$0xff]
        %v1484 = vld [vmem:[#allocation8 + $0x78] sm:$0xff]
        %v1485 = vld [vmem:[#allocation8 + $0x80] sm:$0xff]
        %v1486 = vld [vmem:[#allocation8 + $0x88] sm:$0xff]
        %v1487 = vld [vmem:[#allocation8 + $0x90] sm:$0xff]
        %v1488 = vld [vmem:[#allocation8 + $0x98] sm:$0xff]
        %v1489 = vld [vmem:[#allocation8 + $0xa0] sm:$0xff]
        %v1490 = vld [vmem:[#allocation8 + $0xa8] sm:$0xff]
        %v1491 = vld [vmem:[#allocation8 + $0xb0] sm:$0xff]
        %v1492 = vld [vmem:[#allocation8 + $0xb8] sm:$0xff]
        %v1493 = vld [vmem:[#allocation8 + $0xc0] sm:$0xff]
        %v1494 = vld [vmem:[#allocation8 + $0xc8] sm:$0xff]
        %v1495 = vld [vmem:[#allocation8 + $0xd0] sm:$0xff]
        %v1496 = vld [vmem:[#allocation8 + $0xd8] sm:$0xff]
        %v1497 = vld [vmem:[#allocation8 + $0xe0] sm:$0xff]
        %v1498 = vld [vmem:[#allocation8 + $0xe8] sm:$0xff]
        %v1499 = vld [vmem:[#allocation8 + $0xf0] sm:$0xff]
        %v1500 = vld [vmem:[#allocation8 + $0xf8] sm:$0xff]
        %v1501 = vld [vmem:[%s8] sm:$0xf]
        %v1503 = vlaneseq
        %v1504 = vshrl.u32 %v1503, 7
        %v1505 = vsub.s32 0, %v1504
        %v1506 = vrot.slane %v1501, %v1505
        %v1507 = vlaneseq
        %v1508 = vshrl.u32 %v1507, 7
        %v1509 = vsub.s32 1, %v1508
        %v1510 = vrot.slane %v1501, %v1509
        %v1511 = vlaneseq
        %v1512 = vshrl.u32 %v1511, 7
        %v1513 = vsub.s32 2, %v1512
        %v1514 = vrot.slane %v1501, %v1513
        %v1515 = vlaneseq
        %v1516 = vshrl.u32 %v1515, 7
        %v1517 = vsub.s32 3, %v1516
        %v1518 = vrot.slane %v1501, %v1517
        %v1555 = vunpack.c.l.b16 %v1469
        %v1556 = vunpack.c.h.b16 %v1469
        %v1557 = vunpack.c.l.b16 %v1470
        %v1558 = vunpack.c.h.b16 %v1470
        %v1559 = vunpack.c.l.b16 %v1471
        %v1560 = vunpack.c.h.b16 %v1471
        %v1561 = vunpack.c.l.b16 %v1472
        %v1562 = vunpack.c.h.b16 %v1472
        %v1563 = vunpack.c.l.b16 %v1473
        %v1564 = vunpack.c.h.b16 %v1473
        %v1565 = vunpack.c.l.b16 %v1474
        %v1566 = vunpack.c.h.b16 %v1474
        %v1567 = vunpack.c.l.b16 %v1475
        %v1568 = vunpack.c.h.b16 %v1475
        %v1569 = vunpack.c.l.b16 %v1476
        %v1570 = vunpack.c.h.b16 %v1476
        %v1571 = vunpack.c.l.b16 %v1477
        %v1572 = vunpack.c.h.b16 %v1477
        %v1573 = vunpack.c.l.b16 %v1478
        %v1574 = vunpack.c.h.b16 %v1478
        %v1575 = vunpack.c.l.b16 %v1479
        %v1576 = vunpack.c.h.b16 %v1479
        %v1577 = vunpack.c.l.b16 %v1480
        %v1578 = vunpack.c.h.b16 %v1480
        %v1579 = vunpack.c.l.b16 %v1481
        %v1580 = vunpack.c.h.b16 %v1481
        %v1581 = vunpack.c.l.b16 %v1482
        %v1582 = vunpack.c.h.b16 %v1482
        %v1583 = vunpack.c.l.b16 %v1483
        %v1584 = vunpack.c.h.b16 %v1483
        %v1585 = vunpack.c.l.b16 %v1484
        %v1586 = vunpack.c.h.b16 %v1484
        %v1587 = vunpack.c.l.b16 %v1485
        %v1588 = vunpack.c.h.b16 %v1485
        %v1589 = vunpack.c.l.b16 %v1486
        %v1590 = vunpack.c.h.b16 %v1486
        %v1591 = vunpack.c.l.b16 %v1487
        %v1592 = vunpack.c.h.b16 %v1487
        %v1593 = vunpack.c.l.b16 %v1488
        %v1594 = vunpack.c.h.b16 %v1488
        %v1595 = vunpack.c.l.b16 %v1489
        %v1596 = vunpack.c.h.b16 %v1489
        %v1597 = vunpack.c.l.b16 %v1490
        %v1598 = vunpack.c.h.b16 %v1490
        %v1599 = vunpack.c.l.b16 %v1491
        %v1600 = vunpack.c.h.b16 %v1491
        %v1601 = vunpack.c.l.b16 %v1492
        %v1602 = vunpack.c.h.b16 %v1492
        %v1603 = vunpack.c.l.b16 %v1493
        %v1604 = vunpack.c.h.b16 %v1493
        %v1605 = vunpack.c.l.b16 %v1494
        %v1606 = vunpack.c.h.b16 %v1494
        %v1607 = vunpack.c.l.b16 %v1495
        %v1608 = vunpack.c.h.b16 %v1495
        %v1609 = vunpack.c.l.b16 %v1496
        %v1610 = vunpack.c.h.b16 %v1496
        %v1611 = vunpack.c.l.b16 %v1497
        %v1612 = vunpack.c.h.b16 %v1497
        %v1613 = vunpack.c.l.b16 %v1498
        %v1614 = vunpack.c.h.b16 %v1498
        %v1615 = vunpack.c.l.b16 %v1499
        %v1616 = vunpack.c.h.b16 %v1499
        %v1617 = vunpack.c.l.b16 %v1500
        %v1618 = vunpack.c.h.b16 %v1500
        %v1619 = vpack.c.b16 %v1559, %v1555
        %v1620 = vpack.c.b16 %v1560, %v1556
        %v1621 = vpack.c.b16 %v1561, %v1557
        %v1622 = vpack.c.b16 %v1562, %v1558
        %v1623 = vpack.c.b16 %v1567, %v1563
        %v1624 = vpack.c.b16 %v1568, %v1564
        %v1625 = vpack.c.b16 %v1569, %v1565
        %v1626 = vpack.c.b16 %v1570, %v1566
        %v1627 = vpack.c.b16 %v1575, %v1571
        %v1628 = vpack.c.b16 %v1576, %v1572
        %v1629 = vpack.c.b16 %v1577, %v1573
        %v1630 = vpack.c.b16 %v1578, %v1574
        %v1631 = vpack.c.b16 %v1583, %v1579
        %v1632 = vpack.c.b16 %v1584, %v1580
        %v1633 = vpack.c.b16 %v1585, %v1581
        %v1634 = vpack.c.b16 %v1586, %v1582
        %v1635 = vpack.c.b16 %v1591, %v1587
        %v1636 = vpack.c.b16 %v1592, %v1588
        %v1637 = vpack.c.b16 %v1593, %v1589
        %v1638 = vpack.c.b16 %v1594, %v1590
        %v1639 = vpack.c.b16 %v1599, %v1595
        %v1640 = vpack.c.b16 %v1600, %v1596
        %v1641 = vpack.c.b16 %v1601, %v1597
        %v1642 = vpack.c.b16 %v1602, %v1598
        %v1643 = vpack.c.b16 %v1607, %v1603
        %v1644 = vpack.c.b16 %v1608, %v1604
        %v1645 = vpack.c.b16 %v1609, %v1605
        %v1646 = vpack.c.b16 %v1610, %v1606
        %v1647 = vpack.c.b16 %v1615, %v1611
        %v1648 = vpack.c.b16 %v1616, %v1612
        %v1649 = vpack.c.b16 %v1617, %v1613
        %v1650 = vpack.c.b16 %v1618, %v1614
        %1683 = vmatprep.subr.bf16.mxu0 %v1620
        %1684 = vmatpush1.bf16.msra.mxu0 %v1619
        %1685 = vmatprep.subr.bf16.mxu0 %v1624
        %1686 = vmatpush1.bf16.msra.mxu0 %v1623
        %1687 = vmatprep.subr.bf16.mxu0 %v1628
        %1688 = vmatpush1.bf16.msra.mxu0 %v1627
        %1689 = vmatprep.subr.bf16.mxu0 %v1632
        %1690 = vmatpush1.bf16.msra.mxu0 %v1631
        %1691 = vmatprep.subr.bf16.mxu0 %v1636
        %1692 = vmatpush1.bf16.msra.mxu0 %v1635
        %1693 = vmatprep.subr.bf16.mxu0 %v1640
        %1694 = vmatpush1.bf16.msra.mxu0 %v1639
        %1695 = vmatprep.subr.bf16.mxu0 %v1644
        %1696 = vmatpush1.bf16.msra.mxu0 %v1643
        %1697 = vmatprep.subr.bf16.mxu0 %v1648
        %1698 = vmatpush1.bf16.msra.mxu0 %v1647
        %1699 = vmatprep.subr.bf16.mxu0 0
        %1700 = vmatpush1.bf16.msra.mxu0 0
        %1701 = vmatprep.subr.bf16.mxu0 0
        %1702 = vmatpush1.bf16.msra.mxu0 0
        %1703 = vmatprep.subr.bf16.mxu0 0
        %1704 = vmatpush1.bf16.msra.mxu0 0
        %1705 = vmatprep.subr.bf16.mxu0 0
        %1706 = vmatpush1.bf16.msra.mxu0 0
        %1707 = vmatprep.subr.bf16.mxu0 0
        %1708 = vmatpush1.bf16.msra.mxu0 0
        %1709 = vmatprep.subr.bf16.mxu0 0
        %1710 = vmatpush1.bf16.msra.mxu0 0
        %1711 = vmatprep.subr.bf16.mxu0 0
        %1712 = vmatpush1.bf16.msra.mxu0 0
        %1713 = vmatprep.subr.bf16.mxu0 0
        %1714 = vmatpush1.bf16.msra.mxu0 0
        %1715 = vmatprep.mubr.bf16.mxu0 0
        %1716 = vmatmul.mubr.bf16.gmra.mrb[0].mxu0 %v1453
        %v1717 = vpop.f32.mrb[0].mxu0
        %v1718 = vadd.f32 %v1506, %v1717
        %v1719 = vpop.f32.mrb[0].mxu0
        %v1720 = vadd.f32 %v1510, %v1719
        %v1721 = vpop.f32.mrb[0].mxu0
        %v1722 = vadd.f32 %v1506, %v1721
        %v1723 = vpop.f32.mrb[0].mxu0
        %v1724 = vadd.f32 %v1510, %v1723
        %1725 = vmatprep.mubr.bf16.mxu0 0
        %1726 = vmatmul.mubr.bf16.gmra.mrb[0].mxu0 %v1454
        %v1727 = vpop.f32.mrb[0].mxu0
        %v1728 = vadd.f32 %v1506, %v1727
        %v1729 = vpop.f32.mrb[0].mxu0
        %v1730 = vadd.f32 %v1510, %v1729
        %v1731 = vpop.f32.mrb[0].mxu0
        %v1732 = vadd.f32 %v1506, %v1731
        %v1733 = vpop.f32.mrb[0].mxu0
        %v1734 = vadd.f32 %v1510, %v1733
        %1735 = vmatprep.mubr.bf16.mxu0 0
        %1736 = vmatmul.mubr.bf16.gmra.mrb[0].mxu0 %v1455
        %v1737 = vpop.f32.mrb[0].mxu0
        %v1738 = vadd.f32 %v1506, %v1737
        %v1739 = vpop.f32.mrb[0].mxu0
        %v1740 = vadd.f32 %v1510, %v1739
        %v1741 = vpop.f32.mrb[0].mxu0
        %v1742 = vadd.f32 %v1506, %v1741
        %v1743 = vpop.f32.mrb[0].mxu0
        %v1744 = vadd.f32 %v1510, %v1743
        %1745 = vmatprep.mubr.bf16.mxu0 0
        %1746 = vmatmul.mubr.bf16.gmra.mrb[0].mxu0 %v1456
        %v1747 = vpop.f32.mrb[0].mxu0
        %v1748 = vadd.f32 %v1506, %v1747
        %v1749 = vpop.f32.mrb[0].mxu0
        %v1750 = vadd.f32 %v1510, %v1749
        %v1751 = vpop.f32.mrb[0].mxu0
        %v1752 = vadd.f32 %v1506, %v1751
        %v1753 = vpop.f32.mrb[0].mxu0
        %v1754 = vadd.f32 %v1510, %v1753
        %1755 = vmatprep.mubr.bf16.mxu0 0
        %1756 = vmatmul.mubr.bf16.gmra.mrb[0].mxu0 %v1457
        %v1757 = vpop.f32.mrb[0].mxu0
        %v1758 = vadd.f32 %v1506, %v1757
        %v1759 = vpop.f32.mrb[0].mxu0
        %v1760 = vadd.f32 %v1510, %v1759
        %v1761 = vpop.f32.mrb[0].mxu0
        %v1762 = vadd.f32 %v1506, %v1761
        %v1763 = vpop.f32.mrb[0].mxu0
        %v1764 = vadd.f32 %v1510, %v1763
        %1765 = vmatprep.mubr.bf16.mxu0 0
        %1766 = vmatmul.mubr.bf16.gmra.mrb[0].mxu0 %v1458
        %v1767 = vpop.f32.mrb[0].mxu0
        %v1768 = vadd.f32 %v1506, %v1767
        %v1769 = vpop.f32.mrb[0].mxu0
        %v1770 = vadd.f32 %v1510, %v1769
        %v1771 = vpop.f32.mrb[0].mxu0
        %v1772 = vadd.f32 %v1506, %v1771
        %v1773 = vpop.f32.mrb[0].mxu0
        %v1774 = vadd.f32 %v1510, %v1773
        %1775 = vmatprep.mubr.bf16.mxu0 0
        %1776 = vmatmul.mubr.bf16.gmra.mrb[0].mxu0 %v1459
        %v1777 = vpop.f32.mrb[0].mxu0
        %v1778 = vadd.f32 %v1506, %v1777
        %v1779 = vpop.f32.mrb[0].mxu0
        %v1780 = vadd.f32 %v1510, %v1779
        %v1781 = vpop.f32.mrb[0].mxu0
        %v1782 = vadd.f32 %v1506, %v1781
        %v1783 = vpop.f32.mrb[0].mxu0
        %v1784 = vadd.f32 %v1510, %v1783
        %1785 = vmatprep.mubr.bf16.mxu0 0
        %1786 = vmatmul.mubr.bf16.gmra.mrb[0].mxu0 %v1460
        %v1787 = vpop.f32.mrb[0].mxu0
        %v1788 = vadd.f32 %v1506, %v1787
        %v1789 = vpop.f32.mrb[0].mxu0
        %v1790 = vadd.f32 %v1510, %v1789
        %v1791 = vpop.f32.mrb[0].mxu0
        %v1792 = vadd.f32 %v1506, %v1791
        %v1793 = vpop.f32.mrb[0].mxu0
        %v1794 = vadd.f32 %v1510, %v1793
        %1795 = vmatprep.mubr.bf16.mxu0 0
        %1796 = vmatmul.mubr.bf16.gmra.mrb[0].mxu0 %v1461
        %v1797 = vpop.f32.mrb[0].mxu0
        %v1798 = vadd.f32 %v1506, %v1797
        %v1799 = vpop.f32.mrb[0].mxu0
        %v1800 = vadd.f32 %v1510, %v1799
        %v1801 = vpop.f32.mrb[0].mxu0
        %v1802 = vadd.f32 %v1506, %v1801
        %v1803 = vpop.f32.mrb[0].mxu0
        %v1804 = vadd.f32 %v1510, %v1803
        %1805 = vmatprep.mubr.bf16.mxu0 0
        %1806 = vmatmul.mubr.bf16.gmra.mrb[0].mxu0 %v1462
        %v1807 = vpop.f32.mrb[0].mxu0
        %v1808 = vadd.f32 %v1506, %v1807
        %v1809 = vpop.f32.mrb[0].mxu0
        %v1810 = vadd.f32 %v1510, %v1809
        %v1811 = vpop.f32.mrb[0].mxu0
        %v1812 = vadd.f32 %v1506, %v1811
        %v1813 = vpop.f32.mrb[0].mxu0
        %v1814 = vadd.f32 %v1510, %v1813
        %1815 = vmatprep.mubr.bf16.mxu0 0
        %1816 = vmatmul.mubr.bf16.gmra.mrb[0].mxu0 %v1463
        %v1817 = vpop.f32.mrb[0].mxu0
        %v1818 = vadd.f32 %v1506, %v1817
        %v1819 = vpop.f32.mrb[0].mxu0
        %v1820 = vadd.f32 %v1510, %v1819
        %v1821 = vpop.f32.mrb[0].mxu0
        %v1822 = vadd.f32 %v1506, %v1821
        %v1823 = vpop.f32.mrb[0].mxu0
        %v1824 = vadd.f32 %v1510, %v1823
        %1825 = vmatprep.mubr.bf16.mxu0 0
        %1826 = vmatmul.mubr.bf16.gmra.mrb[0].mxu0 %v1464
        %v1827 = vpop.f32.mrb[0].mxu0
        %v1828 = vadd.f32 %v1506, %v1827
        %v1829 = vpop.f32.mrb[0].mxu0
        %v1830 = vadd.f32 %v1510, %v1829
        %v1831 = vpop.f32.mrb[0].mxu0
        %v1832 = vadd.f32 %v1506, %v1831
        %v1833 = vpop.f32.mrb[0].mxu0
        %v1834 = vadd.f32 %v1510, %v1833
        %1835 = vmatprep.mubr.bf16.mxu0 0
        %1836 = vmatmul.mubr.bf16.gmra.mrb[0].mxu0 %v1465
        %v1837 = vpop.f32.mrb[0].mxu0
        %v1838 = vadd.f32 %v1506, %v1837
        %v1839 = vpop.f32.mrb[0].mxu0
        %v1840 = vadd.f32 %v1510, %v1839
        %v1841 = vpop.f32.mrb[0].mxu0
        %v1842 = vadd.f32 %v1506, %v1841
        %v1843 = vpop.f32.mrb[0].mxu0
        %v1844 = vadd.f32 %v1510, %v1843
        %1845 = vmatprep.mubr.bf16.mxu0 0
        %1846 = vmatmul.mubr.bf16.gmra.mrb[0].mxu0 %v1466
        %v1847 = vpop.f32.mrb[0].mxu0
        %v1848 = vadd.f32 %v1506, %v1847
        %v1849 = vpop.f32.mrb[0].mxu0
        %v1850 = vadd.f32 %v1510, %v1849
        %v1851 = vpop.f32.mrb[0].mxu0
        %v1852 = vadd.f32 %v1506, %v1851
        %v1853 = vpop.f32.mrb[0].mxu0
        %v1854 = vadd.f32 %v1510, %v1853
        %1855 = vmatprep.mubr.bf16.mxu0 0
        %1856 = vmatmul.mubr.bf16.gmra.mrb[0].mxu0 %v1467
        %v1857 = vpop.f32.mrb[0].mxu0
        %v1858 = vadd.f32 %v1506, %v1857
        %v1859 = vpop.f32.mrb[0].mxu0
        %v1860 = vadd.f32 %v1510, %v1859
        %v1861 = vpop.f32.mrb[0].mxu0
        %v1862 = vadd.f32 %v1506, %v1861
        %v1863 = vpop.f32.mrb[0].mxu0
        %v1864 = vadd.f32 %v1510, %v1863
        %1865 = vmatprep.mubr.bf16.mxu0 0
        %1866 = vmatmul.mubr.bf16.gmra.mrb[0].mxu0 %v1468
        %v1867 = vpop.f32.mrb[0].mxu0
        %v1868 = vadd.f32 %v1506, %v1867
        %v1869 = vpop.f32.mrb[0].mxu0
        %v1870 = vadd.f32 %v1510, %v1869
        %v1871 = vpop.f32.mrb[0].mxu0
        %v1872 = vadd.f32 %v1506, %v1871
        %v1873 = vpop.f32.mrb[0].mxu0
        %v1874 = vadd.f32 %v1510, %v1873
        %1875 = vdwg.mxu0
        %1876 = vmatprep.subr.bf16.mxu0 %v1622
        %1877 = vmatpush1.bf16.msra.mxu0 %v1621
        %1878 = vmatprep.subr.bf16.mxu0 %v1626
        %1879 = vmatpush1.bf16.msra.mxu0 %v1625
        %1880 = vmatprep.subr.bf16.mxu0 %v1630
        %1881 = vmatpush1.bf16.msra.mxu0 %v1629
        %1882 = vmatprep.subr.bf16.mxu0 %v1634
        %1883 = vmatpush1.bf16.msra.mxu0 %v1633
        %1884 = vmatprep.subr.bf16.mxu0 %v1638
        %1885 = vmatpush1.bf16.msra.mxu0 %v1637
        %1886 = vmatprep.subr.bf16.mxu0 %v1642
        %1887 = vmatpush1.bf16.msra.mxu0 %v1641
        %1888 = vmatprep.subr.bf16.mxu0 %v1646
        %1889 = vmatpush1.bf16.msra.mxu0 %v1645
        %1890 = vmatprep.subr.bf16.mxu0 %v1650
        %1891 = vmatpush1.bf16.msra.mxu0 %v1649
        %1892 = vmatprep.subr.bf16.mxu0 0
        %1893 = vmatpush1.bf16.msra.mxu0 0
        %1894 = vmatprep.subr.bf16.mxu0 0
        %1895 = vmatpush1.bf16.msra.mxu0 0
        %1896 = vmatprep.subr.bf16.mxu0 0
        %1897 = vmatpush1.bf16.msra.mxu0 0
        %1898 = vmatprep.subr.bf16.mxu0 0
        %1899 = vmatpush1.bf16.msra.mxu0 0
        %1900 = vmatprep.subr.bf16.mxu0 0
        %1901 = vmatpush1.bf16.msra.mxu0 0
        %1902 = vmatprep.subr.bf16.mxu0 0
        %1903 = vmatpush1.bf16.msra.mxu0 0
        %1904 = vmatprep.subr.bf16.mxu0 0
        %1905 = vmatpush1.bf16.msra.mxu0 0
        %1906 = vmatprep.subr.bf16.mxu0 0
        %1907 = vmatpush1.bf16.msra.mxu0 0
        %1908 = vmatprep.mubr.bf16.mxu0 0
        %1909 = vmatmul.mubr.bf16.gmra.mrb[0].mxu0 %v1453
        %v1910 = vpop.f32.mrb[0].mxu0
        %v1911 = vadd.f32 %v1514, %v1910
        %v1912 = vpop.f32.mrb[0].mxu0
        %v1913 = vadd.f32 %v1518, %v1912
        %v1914 = vpop.f32.mrb[0].mxu0
        %v1915 = vadd.f32 %v1514, %v1914
        %v1916 = vpop.f32.mrb[0].mxu0
        %v1917 = vadd.f32 %v1518, %v1916
        %1918 = vmatprep.mubr.bf16.mxu0 0
        %1919 = vmatmul.mubr.bf16.gmra.mrb[0].mxu0 %v1454
        %v1920 = vpop.f32.mrb[0].mxu0
        %v1921 = vadd.f32 %v1514, %v1920
        %v1922 = vpop.f32.mrb[0].mxu0
        %v1923 = vadd.f32 %v1518, %v1922
        %v1924 = vpop.f32.mrb[0].mxu0
        %v1925 = vadd.f32 %v1514, %v1924
        %v1926 = vpop.f32.mrb[0].mxu0
        %v1927 = vadd.f32 %v1518, %v1926
        %1928 = vmatprep.mubr.bf16.mxu0 0
        %1929 = vmatmul.mubr.bf16.gmra.mrb[0].mxu0 %v1455
        %v1930 = vpop.f32.mrb[0].mxu0
        %v1931 = vadd.f32 %v1514, %v1930
        %v1932 = vpop.f32.mrb[0].mxu0
        %v1933 = vadd.f32 %v1518, %v1932
        %v1934 = vpop.f32.mrb[0].mxu0
        %v1935 = vadd.f32 %v1514, %v1934
        %v1936 = vpop.f32.mrb[0].mxu0
        %v1937 = vadd.f32 %v1518, %v1936
        %1938 = vmatprep.mubr.bf16.mxu0 0
        %1939 = vmatmul.mubr.bf16.gmra.mrb[0].mxu0 %v1456
        %v1940 = vpop.f32.mrb[0].mxu0
        %v1941 = vadd.f32 %v1514, %v1940
        %v1942 = vpop.f32.mrb[0].mxu0
        %v1943 = vadd.f32 %v1518, %v1942
        %v1944 = vpop.f32.mrb[0].mxu0
        %v1945 = vadd.f32 %v1514, %v1944
        %v1946 = vpop.f32.mrb[0].mxu0
        %v1947 = vadd.f32 %v1518, %v1946
        %1948 = vmatprep.mubr.bf16.mxu0 0
        %1949 = vmatmul.mubr.bf16.gmra.mrb[0].mxu0 %v1457
        %v1950 = vpop.f32.mrb[0].mxu0
        %v1951 = vadd.f32 %v1514, %v1950
        %v1952 = vpop.f32.mrb[0].mxu0
        %v1953 = vadd.f32 %v1518, %v1952
        %v1954 = vpop.f32.mrb[0].mxu0
        %v1955 = vadd.f32 %v1514, %v1954
        %v1956 = vpop.f32.mrb[0].mxu0
        %v1957 = vadd.f32 %v1518, %v1956
        %1958 = vmatprep.mubr.bf16.mxu0 0
        %1959 = vmatmul.mubr.bf16.gmra.mrb[0].mxu0 %v1458
        %v1960 = vpop.f32.mrb[0].mxu0
        %v1961 = vadd.f32 %v1514, %v1960
        %v1962 = vpop.f32.mrb[0].mxu0
        %v1963 = vadd.f32 %v1518, %v1962
        %v1964 = vpop.f32.mrb[0].mxu0
        %v1965 = vadd.f32 %v1514, %v1964
        %v1966 = vpop.f32.mrb[0].mxu0
        %v1967 = vadd.f32 %v1518, %v1966
        %1968 = vmatprep.mubr.bf16.mxu0 0
        %1969 = vmatmul.mubr.bf16.gmra.mrb[0].mxu0 %v1459
        %v1970 = vpop.f32.mrb[0].mxu0
        %v1971 = vadd.f32 %v1514, %v1970
        %v1972 = vpop.f32.mrb[0].mxu0
        %v1973 = vadd.f32 %v1518, %v1972
        %v1974 = vpop.f32.mrb[0].mxu0
        %v1975 = vadd.f32 %v1514, %v1974
        %v1976 = vpop.f32.mrb[0].mxu0
        %v1977 = vadd.f32 %v1518, %v1976
        %1978 = vmatprep.mubr.bf16.mxu0 0
        %1979 = vmatmul.mubr.bf16.gmra.mrb[0].mxu0 %v1460
        %v1980 = vpop.f32.mrb[0].mxu0
        %v1981 = vadd.f32 %v1514, %v1980
        %v1982 = vpop.f32.mrb[0].mxu0
        %v1983 = vadd.f32 %v1518, %v1982
        %v1984 = vpop.f32.mrb[0].mxu0
        %v1985 = vadd.f32 %v1514, %v1984
        %v1986 = vpop.f32.mrb[0].mxu0
        %v1987 = vadd.f32 %v1518, %v1986
        %1988 = vmatprep.mubr.bf16.mxu0 0
        %1989 = vmatmul.mubr.bf16.gmra.mrb[0].mxu0 %v1461
        %v1990 = vpop.f32.mrb[0].mxu0
        %v1991 = vadd.f32 %v1514, %v1990
        %v1992 = vpop.f32.mrb[0].mxu0
        %v1993 = vadd.f32 %v1518, %v1992
        %v1994 = vpop.f32.mrb[0].mxu0
        %v1995 = vadd.f32 %v1514, %v1994
        %v1996 = vpop.f32.mrb[0].mxu0
        %v1997 = vadd.f32 %v1518, %v1996
        %1998 = vmatprep.mubr.bf16.mxu0 0
        %1999 = vmatmul.mubr.bf16.gmra.mrb[0].mxu0 %v1462
        %v2000 = vpop.f32.mrb[0].mxu0
        %v2001 = vadd.f32 %v1514, %v2000
        %v2002 = vpop.f32.mrb[0].mxu0
        %v2003 = vadd.f32 %v1518, %v2002
        %v2004 = vpop.f32.mrb[0].mxu0
        %v2005 = vadd.f32 %v1514, %v2004
        %v2006 = vpop.f32.mrb[0].mxu0
        %v2007 = vadd.f32 %v1518, %v2006
        %2008 = vmatprep.mubr.bf16.mxu0 0
        %2009 = vmatmul.mubr.bf16.gmra.mrb[0].mxu0 %v1463
        %v2010 = vpop.f32.mrb[0].mxu0
        %v2011 = vadd.f32 %v1514, %v2010
        %v2012 = vpop.f32.mrb[0].mxu0
        %v2013 = vadd.f32 %v1518, %v2012
        %v2014 = vpop.f32.mrb[0].mxu0
        %v2015 = vadd.f32 %v1514, %v2014
        %v2016 = vpop.f32.mrb[0].mxu0
        %v2017 = vadd.f32 %v1518, %v2016
        %2018 = vmatprep.mubr.bf16.mxu0 0
        %2019 = vmatmul.mubr.bf16.gmra.mrb[0].mxu0 %v1464
        %v2020 = vpop.f32.mrb[0].mxu0
        %v2021 = vadd.f32 %v1514, %v2020
        %v2022 = vpop.f32.mrb[0].mxu0
        %v2023 = vadd.f32 %v1518, %v2022
        %v2024 = vpop.f32.mrb[0].mxu0
        %v2025 = vadd.f32 %v1514, %v2024
        %v2026 = vpop.f32.mrb[0].mxu0
        %v2027 = vadd.f32 %v1518, %v2026
        %2028 = vmatprep.mubr.bf16.mxu0 0
        %2029 = vmatmul.mubr.bf16.gmra.mrb[0].mxu0 %v1465
        %v2030 = vpop.f32.mrb[0].mxu0
        %v2031 = vadd.f32 %v1514, %v2030
        %v2032 = vpop.f32.mrb[0].mxu0
        %v2033 = vadd.f32 %v1518, %v2032
        %v2034 = vpop.f32.mrb[0].mxu0
        %v2035 = vadd.f32 %v1514, %v2034
        %v2036 = vpop.f32.mrb[0].mxu0
        %v2037 = vadd.f32 %v1518, %v2036
        %2038 = vmatprep.mubr.bf16.mxu0 0
        %2039 = vmatmul.mubr.bf16.gmra.mrb[0].mxu0 %v1466
        %v2040 = vpop.f32.mrb[0].mxu0
        %v2041 = vadd.f32 %v1514, %v2040
        %v2042 = vpop.f32.mrb[0].mxu0
        %v2043 = vadd.f32 %v1518, %v2042
        %v2044 = vpop.f32.mrb[0].mxu0
        %v2045 = vadd.f32 %v1514, %v2044
        %v2046 = vpop.f32.mrb[0].mxu0
        %v2047 = vadd.f32 %v1518, %v2046
        %2048 = vmatprep.mubr.bf16.mxu0 0
        %2049 = vmatmul.mubr.bf16.gmra.mrb[0].mxu0 %v1467
        %v2050 = vpop.f32.mrb[0].mxu0
        %v2051 = vadd.f32 %v1514, %v2050
        %v2052 = vpop.f32.mrb[0].mxu0
        %v2053 = vadd.f32 %v1518, %v2052
        %v2054 = vpop.f32.mrb[0].mxu0
        %v2055 = vadd.f32 %v1514, %v2054
        %v2056 = vpop.f32.mrb[0].mxu0
        %v2057 = vadd.f32 %v1518, %v2056
        %2058 = vmatprep.mubr.bf16.mxu0 0
        %2059 = vmatmul.mubr.bf16.gmra.mrb[0].mxu0 %v1468
        %v2060 = vpop.f32.mrb[0].mxu0
        %v2061 = vadd.f32 %v1514, %v2060
        %v2062 = vpop.f32.mrb[0].mxu0
        %v2063 = vadd.f32 %v1518, %v2062
        %v2064 = vpop.f32.mrb[0].mxu0
        %v2065 = vadd.f32 %v1514, %v2064
        %v2066 = vpop.f32.mrb[0].mxu0
        %v2067 = vadd.f32 %v1518, %v2066
        %2068 = vdwg.mxu0
        %v2069 = vmax.f32 %v1718, 0.0
        %v2070 = vmax.f32 %v1720, 0.0
        %v2071 = vmax.f32 %v1911, 0.0
        %v2072 = vmax.f32 %v1913, 0.0
        %v2073 = vmax.f32 %v1722, 0.0
        %v2074 = vmax.f32 %v1724, 0.0
        %v2075 = vmax.f32 %v1915, 0.0
        %v2076 = vmax.f32 %v1917, 0.0
        %v2077 = vmax.f32 %v1728, 0.0
        %v2078 = vmax.f32 %v1730, 0.0
        %v2079 = vmax.f32 %v1921, 0.0
        %v2080 = vmax.f32 %v1923, 0.0
        %v2081 = vmax.f32 %v1732, 0.0
        %v2082 = vmax.f32 %v1734, 0.0
        %v2083 = vmax.f32 %v1925, 0.0
        %v2084 = vmax.f32 %v1927, 0.0
        %v2085 = vmax.f32 %v1738, 0.0
        %v2086 = vmax.f32 %v1740, 0.0
        %v2087 = vmax.f32 %v1931, 0.0
        %v2088 = vmax.f32 %v1933, 0.0
        %v2089 = vmax.f32 %v1742, 0.0
        %v2090 = vmax.f32 %v1744, 0.0
        %v2091 = vmax.f32 %v1935, 0.0
        %v2092 = vmax.f32 %v1937, 0.0
        %v2093 = vmax.f32 %v1748, 0.0
        %v2094 = vmax.f32 %v1750, 0.0
        %v2095 = vmax.f32 %v1941, 0.0
        %v2096 = vmax.f32 %v1943, 0.0
        %v2097 = vmax.f32 %v1752, 0.0
        %v2098 = vmax.f32 %v1754, 0.0
        %v2099 = vmax.f32 %v1945, 0.0
        %v2100 = vmax.f32 %v1947, 0.0
        %v2101 = vmax.f32 %v1758, 0.0
        %v2102 = vmax.f32 %v1760, 0.0
        %v2103 = vmax.f32 %v1951, 0.0
        %v2104 = vmax.f32 %v1953, 0.0
        %v2105 = vmax.f32 %v1762, 0.0
        %v2106 = vmax.f32 %v1764, 0.0
        %v2107 = vmax.f32 %v1955, 0.0
        %v2108 = vmax.f32 %v1957, 0.0
        %v2109 = vmax.f32 %v1768, 0.0
        %v2110 = vmax.f32 %v1770, 0.0
        %v2111 = vmax.f32 %v1961, 0.0
        %v2112 = vmax.f32 %v1963, 0.0
        %v2113 = vmax.f32 %v1772, 0.0
        %v2114 = vmax.f32 %v1774, 0.0
        %v2115 = vmax.f32 %v1965, 0.0
        %v2116 = vmax.f32 %v1967, 0.0
        %v2117 = vmax.f32 %v1778, 0.0
        %v2118 = vmax.f32 %v1780, 0.0
        %v2119 = vmax.f32 %v1971, 0.0
        %v2120 = vmax.f32 %v1973, 0.0
        %v2121 = vmax.f32 %v1782, 0.0
        %v2122 = vmax.f32 %v1784, 0.0
        %v2123 = vmax.f32 %v1975, 0.0
        %v2124 = vmax.f32 %v1977, 0.0
        %v2125 = vmax.f32 %v1788, 0.0
        %v2126 = vmax.f32 %v1790, 0.0
        %v2127 = vmax.f32 %v1981, 0.0
        %v2128 = vmax.f32 %v1983, 0.0
        %v2129 = vmax.f32 %v1792, 0.0
        %v2130 = vmax.f32 %v1794, 0.0
        %v2131 = vmax.f32 %v1985, 0.0
        %v2132 = vmax.f32 %v1987, 0.0
        %v2133 = vmax.f32 %v1798, 0.0
        %v2134 = vmax.f32 %v1800, 0.0
        %v2135 = vmax.f32 %v1991, 0.0
        %v2136 = vmax.f32 %v1993, 0.0
        %v2137 = vmax.f32 %v1802, 0.0
        %v2138 = vmax.f32 %v1804, 0.0
        %v2139 = vmax.f32 %v1995, 0.0
        %v2140 = vmax.f32 %v1997, 0.0
        %v2141 = vmax.f32 %v1808, 0.0
        %v2142 = vmax.f32 %v1810, 0.0
        %v2143 = vmax.f32 %v2001, 0.0
        %v2144 = vmax.f32 %v2003, 0.0
        %v2145 = vmax.f32 %v1812, 0.0
        %v2146 = vmax.f32 %v1814, 0.0
        %v2147 = vmax.f32 %v2005, 0.0
        %v2148 = vmax.f32 %v2007, 0.0
        %v2149 = vmax.f32 %v1818, 0.0
        %v2150 = vmax.f32 %v1820, 0.0
        %v2151 = vmax.f32 %v2011, 0.0
        %v2152 = vmax.f32 %v2013, 0.0
        %v2153 = vmax.f32 %v1822, 0.0
        %v2154 = vmax.f32 %v1824, 0.0
        %v2155 = vmax.f32 %v2015, 0.0
        %v2156 = vmax.f32 %v2017, 0.0
        %v2157 = vmax.f32 %v1828, 0.0
        %v2158 = vmax.f32 %v1830, 0.0
        %v2159 = vmax.f32 %v2021, 0.0
        %v2160 = vmax.f32 %v2023, 0.0
        %v2161 = vmax.f32 %v1832, 0.0
        %v2162 = vmax.f32 %v1834, 0.0
        %v2163 = vmax.f32 %v2025, 0.0
        %v2164 = vmax.f32 %v2027, 0.0
        %v2165 = vmax.f32 %v1838, 0.0
        %v2166 = vmax.f32 %v1840, 0.0
        %v2167 = vmax.f32 %v2031, 0.0
        %v2168 = vmax.f32 %v2033, 0.0
        %v2169 = vmax.f32 %v1842, 0.0
        %v2170 = vmax.f32 %v1844, 0.0
        %v2171 = vmax.f32 %v2035, 0.0
        %v2172 = vmax.f32 %v2037, 0.0
        %v2173 = vmax.f32 %v1848, 0.0
        %v2174 = vmax.f32 %v1850, 0.0
        %v2175 = vmax.f32 %v2041, 0.0
        %v2176 = vmax.f32 %v2043, 0.0
        %v2177 = vmax.f32 %v1852, 0.0
        %v2178 = vmax.f32 %v1854, 0.0
        %v2179 = vmax.f32 %v2045, 0.0
        %v2180 = vmax.f32 %v2047, 0.0
        %v2181 = vmax.f32 %v1858, 0.0
        %v2182 = vmax.f32 %v1860, 0.0
        %v2183 = vmax.f32 %v2051, 0.0
        %v2184 = vmax.f32 %v2053, 0.0
        %v2185 = vmax.f32 %v1862, 0.0
        %v2186 = vmax.f32 %v1864, 0.0
        %v2187 = vmax.f32 %v2055, 0.0
        %v2188 = vmax.f32 %v2057, 0.0
        %v2189 = vmax.f32 %v1868, 0.0
        %v2190 = vmax.f32 %v1870, 0.0
        %v2191 = vmax.f32 %v2061, 0.0
        %v2192 = vmax.f32 %v2063, 0.0
        %v2193 = vmax.f32 %v1872, 0.0
        %v2194 = vmax.f32 %v1874, 0.0
        %v2195 = vmax.f32 %v2065, 0.0
        %v2196 = vmax.f32 %v2067, 0.0
        %v2197 = vpack.c.bf16 %v2073, %v2069
        %v2198 = vpack.c.bf16 %v2074, %v2070
        %v2199 = vpack.c.bf16 %v2075, %v2071
        %v2200 = vpack.c.bf16 %v2076, %v2072
        %v2201 = vpack.c.bf16 %v2081, %v2077
        %v2202 = vpack.c.bf16 %v2082, %v2078
        %v2203 = vpack.c.bf16 %v2083, %v2079
        %v2204 = vpack.c.bf16 %v2084, %v2080
        %v2205 = vpack.c.bf16 %v2089, %v2085
        %v2206 = vpack.c.bf16 %v2090, %v2086
        %v2207 = vpack.c.bf16 %v2091, %v2087
        %v2208 = vpack.c.bf16 %v2092, %v2088
        %v2209 = vpack.c.bf16 %v2097, %v2093
        %v2210 = vpack.c.bf16 %v2098, %v2094
        %v2211 = vpack.c.bf16 %v2099, %v2095
        %v2212 = vpack.c.bf16 %v2100, %v2096
        %v2213 = vpack.c.bf16 %v2105, %v2101
        %v2214 = vpack.c.bf16 %v2106, %v2102
        %v2215 = vpack.c.bf16 %v2107, %v2103
        %v2216 = vpack.c.bf16 %v2108, %v2104
        %v2217 = vpack.c.bf16 %v2113, %v2109
        %v2218 = vpack.c.bf16 %v2114, %v2110
        %v2219 = vpack.c.bf16 %v2115, %v2111
        %v2220 = vpack.c.bf16 %v2116, %v2112
        %v2221 = vpack.c.bf16 %v2121, %v2117
        %v2222 = vpack.c.bf16 %v2122, %v2118
        %v2223 = vpack.c.bf16 %v2123, %v2119
        %v2224 = vpack.c.bf16 %v2124, %v2120
        %v2225 = vpack.c.bf16 %v2129, %v2125
        %v2226 = vpack.c.bf16 %v2130, %v2126
        %v2227 = vpack.c.bf16 %v2131, %v2127
        %v2228 = vpack.c.bf16 %v2132, %v2128
        %v2229 = vpack.c.bf16 %v2137, %v2133
        %v2230 = vpack.c.bf16 %v2138, %v2134
        %v2231 = vpack.c.bf16 %v2139, %v2135
        %v2232 = vpack.c.bf16 %v2140, %v2136
        %v2233 = vpack.c.bf16 %v2145, %v2141
        %v2234 = vpack.c.bf16 %v2146, %v2142
        %v2235 = vpack.c.bf16 %v2147, %v2143
        %v2236 = vpack.c.bf16 %v2148, %v2144
        %v2237 = vpack.c.bf16 %v2153, %v2149
        %v2238 = vpack.c.bf16 %v2154, %v2150
        %v2239 = vpack.c.bf16 %v2155, %v2151
        %v2240 = vpack.c.bf16 %v2156, %v2152
        %v2241 = vpack.c.bf16 %v2161, %v2157
        %v2242 = vpack.c.bf16 %v2162, %v2158
        %v2243 = vpack.c.bf16 %v2163, %v2159
        %v2244 = vpack.c.bf16 %v2164, %v2160
        %v2245 = vpack.c.bf16 %v2169, %v2165
        %v2246 = vpack.c.bf16 %v2170, %v2166
        %v2247 = vpack.c.bf16 %v2171, %v2167
        %v2248 = vpack.c.bf16 %v2172, %v2168
        %v2249 = vpack.c.bf16 %v2177, %v2173
        %v2250 = vpack.c.bf16 %v2178, %v2174
        %v2251 = vpack.c.bf16 %v2179, %v2175
        %v2252 = vpack.c.bf16 %v2180, %v2176
        %v2253 = vpack.c.bf16 %v2185, %v2181
        %v2254 = vpack.c.bf16 %v2186, %v2182
        %v2255 = vpack.c.bf16 %v2187, %v2183
        %v2256 = vpack.c.bf16 %v2188, %v2184
        %v2257 = vpack.c.bf16 %v2193, %v2189
        %v2258 = vpack.c.bf16 %v2194, %v2190
        %v2259 = vpack.c.bf16 %v2195, %v2191
        %v2260 = vpack.c.bf16 %v2196, %v2192
        %v2325 = vunpack.c.l.b16 %v2197
        %v2326 = vunpack.c.l.b16 %v2198
        %v2327 = vunpack.c.l.b16 %v2199
        %v2328 = vunpack.c.l.b16 %v2200
        %v2329 = vunpack.c.h.b16 %v2197
        %v2330 = vunpack.c.h.b16 %v2198
        %v2331 = vunpack.c.h.b16 %v2199
        %v2332 = vunpack.c.h.b16 %v2200
        %v2333 = vunpack.c.l.b16 %v2201
        %v2334 = vunpack.c.l.b16 %v2202
        %v2335 = vunpack.c.l.b16 %v2203
        %v2336 = vunpack.c.l.b16 %v2204
        %v2337 = vunpack.c.h.b16 %v2201
        %v2338 = vunpack.c.h.b16 %v2202
        %v2339 = vunpack.c.h.b16 %v2203
        %v2340 = vunpack.c.h.b16 %v2204
        %v2341 = vunpack.c.l.b16 %v2205
        %v2342 = vunpack.c.l.b16 %v2206
        %v2343 = vunpack.c.l.b16 %v2207
        %v2344 = vunpack.c.l.b16 %v2208
        %v2345 = vunpack.c.h.b16 %v2205
        %v2346 = vunpack.c.h.b16 %v2206
        %v2347 = vunpack.c.h.b16 %v2207
        %v2348 = vunpack.c.h.b16 %v2208
        %v2349 = vunpack.c.l.b16 %v2209
        %v2350 = vunpack.c.l.b16 %v2210
        %v2351 = vunpack.c.l.b16 %v2211
        %v2352 = vunpack.c.l.b16 %v2212
        %v2353 = vunpack.c.h.b16 %v2209
        %v2354 = vunpack.c.h.b16 %v2210
        %v2355 = vunpack.c.h.b16 %v2211
        %v2356 = vunpack.c.h.b16 %v2212
        %v2357 = vunpack.c.l.b16 %v2213
        %v2358 = vunpack.c.l.b16 %v2214
        %v2359 = vunpack.c.l.b16 %v2215
        %v2360 = vunpack.c.l.b16 %v2216
        %v2361 = vunpack.c.h.b16 %v2213
        %v2362 = vunpack.c.h.b16 %v2214
        %v2363 = vunpack.c.h.b16 %v2215
        %v2364 = vunpack.c.h.b16 %v2216
        %v2365 = vunpack.c.l.b16 %v2217
        %v2366 = vunpack.c.l.b16 %v2218
        %v2367 = vunpack.c.l.b16 %v2219
        %v2368 = vunpack.c.l.b16 %v2220
        %v2369 = vunpack.c.h.b16 %v2217
        %v2370 = vunpack.c.h.b16 %v2218
        %v2371 = vunpack.c.h.b16 %v2219
        %v2372 = vunpack.c.h.b16 %v2220
        %v2373 = vunpack.c.l.b16 %v2221
        %v2374 = vunpack.c.l.b16 %v2222
        %v2375 = vunpack.c.l.b16 %v2223
        %v2376 = vunpack.c.l.b16 %v2224
        %v2377 = vunpack.c.h.b16 %v2221
        %v2378 = vunpack.c.h.b16 %v2222
        %v2379 = vunpack.c.h.b16 %v2223
        %v2380 = vunpack.c.h.b16 %v2224
        %v2381 = vunpack.c.l.b16 %v2225
        %v2382 = vunpack.c.l.b16 %v2226
        %v2383 = vunpack.c.l.b16 %v2227
        %v2384 = vunpack.c.l.b16 %v2228
        %v2385 = vunpack.c.h.b16 %v2225
        %v2386 = vunpack.c.h.b16 %v2226
        %v2387 = vunpack.c.h.b16 %v2227
        %v2388 = vunpack.c.h.b16 %v2228
        %v2389 = vunpack.c.l.b16 %v2229
        %v2390 = vunpack.c.l.b16 %v2230
        %v2391 = vunpack.c.l.b16 %v2231
        %v2392 = vunpack.c.l.b16 %v2232
        %v2393 = vunpack.c.h.b16 %v2229
        %v2394 = vunpack.c.h.b16 %v2230
        %v2395 = vunpack.c.h.b16 %v2231
        %v2396 = vunpack.c.h.b16 %v2232
        %v2397 = vunpack.c.l.b16 %v2233
        %v2398 = vunpack.c.l.b16 %v2234
        %v2399 = vunpack.c.l.b16 %v2235
        %v2400 = vunpack.c.l.b16 %v2236
        %v2401 = vunpack.c.h.b16 %v2233
        %v2402 = vunpack.c.h.b16 %v2234
        %v2403 = vunpack.c.h.b16 %v2235
        %v2404 = vunpack.c.h.b16 %v2236
        %v2405 = vunpack.c.l.b16 %v2237
        %v2406 = vunpack.c.l.b16 %v2238
        %v2407 = vunpack.c.l.b16 %v2239
        %v2408 = vunpack.c.l.b16 %v2240
        %v2409 = vunpack.c.h.b16 %v2237
        %v2410 = vunpack.c.h.b16 %v2238
        %v2411 = vunpack.c.h.b16 %v2239
        %v2412 = vunpack.c.h.b16 %v2240
        %v2413 = vunpack.c.l.b16 %v2241
        %v2414 = vunpack.c.l.b16 %v2242
        %v2415 = vunpack.c.l.b16 %v2243
        %v2416 = vunpack.c.l.b16 %v2244
        %v2417 = vunpack.c.h.b16 %v2241
        %v2418 = vunpack.c.h.b16 %v2242
        %v2419 = vunpack.c.h.b16 %v2243
        %v2420 = vunpack.c.h.b16 %v2244
        %v2421 = vunpack.c.l.b16 %v2245
        %v2422 = vunpack.c.l.b16 %v2246
        %v2423 = vunpack.c.l.b16 %v2247
        %v2424 = vunpack.c.l.b16 %v2248
        %v2425 = vunpack.c.h.b16 %v2245
        %v2426 = vunpack.c.h.b16 %v2246
        %v2427 = vunpack.c.h.b16 %v2247
        %v2428 = vunpack.c.h.b16 %v2248
        %v2429 = vunpack.c.l.b16 %v2249
        %v2430 = vunpack.c.l.b16 %v2250
        %v2431 = vunpack.c.l.b16 %v2251
        %v2432 = vunpack.c.l.b16 %v2252
        %v2433 = vunpack.c.h.b16 %v2249
        %v2434 = vunpack.c.h.b16 %v2250
        %v2435 = vunpack.c.h.b16 %v2251
        %v2436 = vunpack.c.h.b16 %v2252
        %v2437 = vunpack.c.l.b16 %v2253
        %v2438 = vunpack.c.l.b16 %v2254
        %v2439 = vunpack.c.l.b16 %v2255
        %v2440 = vunpack.c.l.b16 %v2256
        %v2441 = vunpack.c.h.b16 %v2253
        %v2442 = vunpack.c.h.b16 %v2254
        %v2443 = vunpack.c.h.b16 %v2255
        %v2444 = vunpack.c.h.b16 %v2256
        %v2445 = vunpack.c.l.b16 %v2257
        %v2446 = vunpack.c.l.b16 %v2258
        %v2447 = vunpack.c.l.b16 %v2259
        %v2448 = vunpack.c.l.b16 %v2260
        %v2449 = vunpack.c.h.b16 %v2257
        %v2450 = vunpack.c.h.b16 %v2258
        %v2451 = vunpack.c.h.b16 %v2259
        %v2452 = vunpack.c.h.b16 %v2260
        %v2453 = vpack.c.b16 %v2326, %v2325
        %v2454 = vpack.c.b16 %v2328, %v2327
        %v2455 = vpack.c.b16 %v2330, %v2329
        %v2456 = vpack.c.b16 %v2332, %v2331
        %v2457 = vpack.c.b16 %v2334, %v2333
        %v2458 = vpack.c.b16 %v2336, %v2335
        %v2459 = vpack.c.b16 %v2338, %v2337
        %v2460 = vpack.c.b16 %v2340, %v2339
        %v2461 = vpack.c.b16 %v2342, %v2341
        %v2462 = vpack.c.b16 %v2344, %v2343
        %v2463 = vpack.c.b16 %v2346, %v2345
        %v2464 = vpack.c.b16 %v2348, %v2347
        %v2465 = vpack.c.b16 %v2350, %v2349
        %v2466 = vpack.c.b16 %v2352, %v2351
        %v2467 = vpack.c.b16 %v2354, %v2353
        %v2468 = vpack.c.b16 %v2356, %v2355
        %v2469 = vpack.c.b16 %v2358, %v2357
        %v2470 = vpack.c.b16 %v2360, %v2359
        %v2471 = vpack.c.b16 %v2362, %v2361
        %v2472 = vpack.c.b16 %v2364, %v2363
        %v2473 = vpack.c.b16 %v2366, %v2365
        %v2474 = vpack.c.b16 %v2368, %v2367
        %v2475 = vpack.c.b16 %v2370, %v2369
        %v2476 = vpack.c.b16 %v2372, %v2371
        %v2477 = vpack.c.b16 %v2374, %v2373
        %v2478 = vpack.c.b16 %v2376, %v2375
        %v2479 = vpack.c.b16 %v2378, %v2377
        %v2480 = vpack.c.b16 %v2380, %v2379
        %v2481 = vpack.c.b16 %v2382, %v2381
        %v2482 = vpack.c.b16 %v2384, %v2383
        %v2483 = vpack.c.b16 %v2386, %v2385
        %v2484 = vpack.c.b16 %v2388, %v2387
        %v2485 = vpack.c.b16 %v2390, %v2389
        %v2486 = vpack.c.b16 %v2392, %v2391
        %v2487 = vpack.c.b16 %v2394, %v2393
        %v2488 = vpack.c.b16 %v2396, %v2395
        %v2489 = vpack.c.b16 %v2398, %v2397
        %v2490 = vpack.c.b16 %v2400, %v2399
        %v2491 = vpack.c.b16 %v2402, %v2401
        %v2492 = vpack.c.b16 %v2404, %v2403
        %v2493 = vpack.c.b16 %v2406, %v2405
        %v2494 = vpack.c.b16 %v2408, %v2407
        %v2495 = vpack.c.b16 %v2410, %v2409
        %v2496 = vpack.c.b16 %v2412, %v2411
        %v2497 = vpack.c.b16 %v2414, %v2413
        %v2498 = vpack.c.b16 %v2416, %v2415
        %v2499 = vpack.c.b16 %v2418, %v2417
        %v2500 = vpack.c.b16 %v2420, %v2419
        %v2501 = vpack.c.b16 %v2422, %v2421
        %v2502 = vpack.c.b16 %v2424, %v2423
        %v2503 = vpack.c.b16 %v2426, %v2425
        %v2504 = vpack.c.b16 %v2428, %v2427
        %v2505 = vpack.c.b16 %v2430, %v2429
        %v2506 = vpack.c.b16 %v2432, %v2431
        %v2507 = vpack.c.b16 %v2434, %v2433
        %v2508 = vpack.c.b16 %v2436, %v2435
        %v2509 = vpack.c.b16 %v2438, %v2437
        %v2510 = vpack.c.b16 %v2440, %v2439
        %v2511 = vpack.c.b16 %v2442, %v2441
        %v2512 = vpack.c.b16 %v2444, %v2443
        %v2513 = vpack.c.b16 %v2446, %v2445
        %v2514 = vpack.c.b16 %v2448, %v2447
        %v2515 = vpack.c.b16 %v2450, %v2449
        %v2516 = vpack.c.b16 %v2452, %v2451
        %2581 = vst [vmem:[%s394] sm:$0xff] %v2453
        %2582 = vst [vmem:[%s394 + $0x8] sm:$0xff] %v2454
        %2583 = vst [vmem:[%s394 + $0x10] sm:$0xff] %v2455
        %2584 = vst [vmem:[%s394 + $0x18] sm:$0xff] %v2456
        %2585 = vst [vmem:[%s394 + $0x20] sm:$0xff] %v2457
        %2586 = vst [vmem:[%s394 + $0x28] sm:$0xff] %v2458
        %2587 = vst [vmem:[%s394 + $0x30] sm:$0xff] %v2459
        %2588 = vst [vmem:[%s394 + $0x38] sm:$0xff] %v2460
        %2589 = vst [vmem:[%s394 + $0x40] sm:$0xff] %v2461
        %2590 = vst [vmem:[%s394 + $0x48] sm:$0xff] %v2462
        %2591 = vst [vmem:[%s394 + $0x50] sm:$0xff] %v2463
        %2592 = vst [vmem:[%s394 + $0x58] sm:$0xff] %v2464
        %2593 = vst [vmem:[%s394 + $0x60] sm:$0xff] %v2465
        %2594 = vst [vmem:[%s394 + $0x68] sm:$0xff] %v2466
        %2595 = vst [vmem:[%s394 + $0x70] sm:$0xff] %v2467
        %2596 = vst [vmem:[%s394 + $0x78] sm:$0xff] %v2468
        %2597 = vst [vmem:[%s394 + $0x80] sm:$0xff] %v2469
        %2598 = vst [vmem:[%s394 + $0x88] sm:$0xff] %v2470
        %2599 = vst [vmem:[%s394 + $0x90] sm:$0xff] %v2471
        %2600 = vst [vmem:[%s394 + $0x98] sm:$0xff] %v2472
        %2601 = vst [vmem:[%s394 + $0xa0] sm:$0xff] %v2473
        %2602 = vst [vmem:[%s394 + $0xa8] sm:$0xff] %v2474
        %2603 = vst [vmem:[%s394 + $0xb0] sm:$0xff] %v2475
        %2604 = vst [vmem:[%s394 + $0xb8] sm:$0xff] %v2476
        %2605 = vst [vmem:[%s394 + $0xc0] sm:$0xff] %v2477
        %2606 = vst [vmem:[%s394 + $0xc8] sm:$0xff] %v2478
        %2607 = vst [vmem:[%s394 + $0xd0] sm:$0xff] %v2479
        %2608 = vst [vmem:[%s394 + $0xd8] sm:$0xff] %v2480
        %2609 = vst [vmem:[%s394 + $0xe0] sm:$0xff] %v2481
        %2610 = vst [vmem:[%s394 + $0xe8] sm:$0xff] %v2482
        %2611 = vst [vmem:[%s394 + $0xf0] sm:$0xff] %v2483
        %2612 = vst [vmem:[%s394 + $0xf8] sm:$0xff] %v2484
        %2613 = vst [vmem:[%s394 + $0x100] sm:$0xff] %v2485
        %2614 = vst [vmem:[%s394 + $0x108] sm:$0xff] %v2486
        %2615 = vst [vmem:[%s394 + $0x110] sm:$0xff] %v2487
        %2616 = vst [vmem:[%s394 + $0x118] sm:$0xff] %v2488
        %2617 = vst [vmem:[%s394 + $0x120] sm:$0xff] %v2489
        %2618 = vst [vmem:[%s394 + $0x128] sm:$0xff] %v2490
        %2619 = vst [vmem:[%s394 + $0x130] sm:$0xff] %v2491
        %2620 = vst [vmem:[%s394 + $0x138] sm:$0xff] %v2492
        %2621 = vst [vmem:[%s394 + $0x140] sm:$0xff] %v2493
        %2622 = vst [vmem:[%s394 + $0x148] sm:$0xff] %v2494
        %2623 = vst [vmem:[%s394 + $0x150] sm:$0xff] %v2495
        %2624 = vst [vmem:[%s394 + $0x158] sm:$0xff] %v2496
        %2625 = vst [vmem:[%s394 + $0x160] sm:$0xff] %v2497
        %2626 = vst [vmem:[%s394 + $0x168] sm:$0xff] %v2498
        %2627 = vst [vmem:[%s394 + $0x170] sm:$0xff] %v2499
        %2628 = vst [vmem:[%s394 + $0x178] sm:$0xff] %v2500
        %2629 = vst [vmem:[%s394 + $0x180] sm:$0xff] %v2501
        %2630 = vst [vmem:[%s394 + $0x188] sm:$0xff] %v2502
        %2631 = vst [vmem:[%s394 + $0x190] sm:$0xff] %v2503
        %2632 = vst [vmem:[%s394 + $0x198] sm:$0xff] %v2504
        %2633 = vst [vmem:[%s394 + $0x1a0] sm:$0xff] %v2505
        %2634 = vst [vmem:[%s394 + $0x1a8] sm:$0xff] %v2506
        %2635 = vst [vmem:[%s394 + $0x1b0] sm:$0xff] %v2507
        %2636 = vst [vmem:[%s394 + $0x1b8] sm:$0xff] %v2508
        %2637 = vst [vmem:[%s394 + $0x1c0] sm:$0xff] %v2509
        %2638 = vst [vmem:[%s394 + $0x1c8] sm:$0xff] %v2510
        %2639 = vst [vmem:[%s394 + $0x1d0] sm:$0xff] %v2511
        %2640 = vst [vmem:[%s394 + $0x1d8] sm:$0xff] %v2512
        %2641 = vst [vmem:[%s394 + $0x1e0] sm:$0xff] %v2513
        %2642 = vst [vmem:[%s394 + $0x1e8] sm:$0xff] %v2514
        %2643 = vst [vmem:[%s394 + $0x1f0] sm:$0xff] %v2515
        %2644 = vst [vmem:[%s394 + $0x1f8] sm:$0xff] %v2516
        %s2645 = sand.u32 %s230, 1
        %s2646 = scalar_lea.sflag [#allocation4], %s2645
        %s2647 = sand.u32 %s230, 1
        %s2648 = smul.addr %s2647, 512
        %s2649 = scalar_lea.vmem [#allocation10], %s2648
        // Predicated region
        $region73: #{tpu_custom_call.1} parent=55 // pred_check
          %p2650 = pneg %p240
        $region74: #{tpu_custom_call.1} parent=55 // pred_check_branch
          %2652 = sbr.rel (%p2650) target = $region76
        $region75: #{tpu_custom_call.1} parent=55 // pred_region
          %s2653 = smul.u32 32, %s28
          %s2655 = ssub.s32 8192, 8192
          %2656 = vsyncadd %s2646, %s2655
          %s2657 = smul.addr %s2653, 4
          %s2658 = smul.addr %s2657, 64
          %s2659 = scalar_lea.hbm %s9, %s2658
          %s2660 = sshll.u32 %s2649, 4
          %s2661 = int_to_ptr.vmem [resolvable:$true] %s2660
          %2666 = dma.vmem_to_hbm [thread:$0]  %s2661, 8192, %s2659, %s2646, 256, 256, 16
        $region76: #{tpu_custom_call.1} parent=55 // pred_fallthru
          _
      $region56: #{tpu_custom_call.1} parent=5 // pred_fallthru
        _
      %p2667 = scmp.le.s32.totalorder 2, %s23
      // Predicated region
      $region77: #{tpu_custom_call.1} parent=5 // pred_check
        %p2668 = pneg %p2667
      $region78: #{tpu_custom_call.1} parent=5 // pred_check_branch
        %2670 = sbr.rel (%p2668) target = $region80
      $region79: #{tpu_custom_call.1} parent=5 // pred_region
        %s2671 = ssub.s32 %s23, 2
        // Predicated region
        $region81: #{tpu_custom_call.1} parent=79 // pred_check
          %p2672 = pneg %p246
        $region82: #{tpu_custom_call.1} parent=79 // pred_check_branch
          %2674 = sbr.rel (%p2672) target = $region84
        $region83: #{tpu_custom_call.1} parent=79 // pred_region
          %s2675 = sand.u32 %s231, 1
          %s2676 = scalar_lea.sflag [#allocation4], %s2675
          %s2677 = sand.u32 %s231, 1
          %s2678 = smul.addr %s2677, 512
          %s2679 = scalar_lea.vmem [#allocation10], %s2678
          %2680 = dma.done %s2676, 8192
        $region84: #{tpu_custom_call.1} parent=79 // pred_fallthru
          _
      $region80: #{tpu_custom_call.1} parent=5 // pred_fallthru
        _
    $region6: #{tpu_custom_call.1} parent=1 // loop_footer
      %s27 = sadd.s32 1, %s23
    $region7: #{tpu_custom_call.1} parent=1 // loop_footer_branch
      %22 = sbr.rel target = $region3
    $region8: #{tpu_custom_call.1} parent=1 // loop_exit
      _
    %2681 = vsyncpa [#allocation3], 1
    %s2682 = scalar_lea.sflag [#allocation3], 1
    %2683 = vsyncpa %s2682, 1
    %2684 = vsyncpa [#allocation6], 1
    %2685 = vsyncpa [#allocation9], 1
    %2686 = vsyncpa [#allocation4], 1
    %s2687 = scalar_lea.sflag [#allocation4], 1
    %2688 = vsyncpa %s2687, 1

</llo_original>
